<compile_context>
chip_gen: v6e
topology: v6e:2x2x1
jax: 0.10.0
libtpu: 0.0.40
codegen_flags: <defaults>
</compile_context>

<pallas_src>
import functools

import jax
import jax.numpy as jnp
from jax.experimental import pallas as pl
from jax.experimental.pallas import tpu as pltpu

IN_DIM, H1, H2, OUT_DIM = 100, 256, 256, 784


def _round_up(n, m):
    return ((n + m - 1) // m) * m


def _generater_kernel(x_ref, w1_ref, b1_ref, w2_ref, b2_ref, w3_ref, b3_ref,
                      o_ref):
    # Fused 3-layer MLP on one batch tile; all operands resident in VMEM.
    # bf16 MXU inputs, f32 accumulation, f32 elementwise (safe on v5e's VPU/EUP).
    x = x_ref[...].astype(jnp.bfloat16)                               # (tb, 100)
    h1 = jnp.dot(x, w1_ref[...], preferred_element_type=jnp.float32)  # (tb, 256)
    h1 = jnp.maximum(h1 + b1_ref[...], 0.0)
    h2 = jnp.dot(h1.astype(jnp.bfloat16), w2_ref[...],
                 preferred_element_type=jnp.float32)                  # (tb, 256)
    h2 = jnp.maximum(h2 + b2_ref[...], 0.0)
    h3 = jnp.dot(h2.astype(jnp.bfloat16), w3_ref[...],
                 preferred_element_type=jnp.float32)                  # (tb, 784)
    o_ref[...] = jnp.tanh(h3 + b3_ref[...]).astype(o_ref.dtype)


def prepare_params(w1, b1, w2, b2, w3, b3):
    """One-time conversion of f32 params to kernel layout (call once, reuse)."""
    bf, f32 = jnp.bfloat16, jnp.float32
    return (w1.astype(bf), b1.reshape(1, H1).astype(f32),
            w2.astype(bf), b2.reshape(1, H2).astype(f32),
            w3.astype(bf), b3.reshape(1, OUT_DIM).astype(f32))


@functools.partial(jax.jit, static_argnames=("tb_max",))
def generater_forward(x, w1, b1, w2, b2, w3, b3, *, tb_max=512):
    """x: (B, 100) f32. Params must come from prepare_params (bf16 W, f32 b)."""
    B = x.shape[0]
    # Batch tile: big enough to amortize the ~0.35us/step overhead, capped so
    # v5e's 16MB scoped-VMEM default still holds (tb=512 ~ 8MB total).
    tb = min(tb_max, _round_up(B, 8))
    grid = (pl.cdiv(B, tb),)   # ragged last tile is handled by Pallas (writes clipped)

    # Weights/biases: full-array blocks, same block every grid step.
    def full(arr):
        return pl.BlockSpec(arr.shape, lambda i: (0,) * arr.ndim)

    flops = 2 * B * (IN_DIM * H1 + H1 * H2 + H2 * OUT_DIM)
    bytes_accessed = (
        x.size * 4
        + (w1.size + w2.size + w3.size) * 2          # bf16 weights
        + (b1.size + b2.size + b3.size) * 4          # f32 biases
        + B * OUT_DIM * 4                            # f32 output
    )

    return pl.pallas_call(
        _generater_kernel,
        out_shape=jax.ShapeDtypeStruct((B, OUT_DIM), jnp.float32),
        grid_spec=pltpu.PrefetchScalarGridSpec(
            num_scalar_prefetch=0,
            grid=grid,
            in_specs=[
                pl.BlockSpec((tb, IN_DIM), lambda i: (i, 0)),   # x tile (f32)
                full(w1), full(b1),
                full(w2), full(b2),
                full(w3), full(b3),
            ],
            out_specs=pl.BlockSpec((tb, OUT_DIM), lambda i: (i, 0)),
        ),
        compiler_params=pltpu.CompilerParams(
            dimension_semantics=("parallel",)),
        cost_estimate=pl.CostEstimate(
            flops=flops,
            transcendentals=B * OUT_DIM,              # tanh
            bytes_accessed=bytes_accessed),
    )(x, w1, b1, w2, b2, w3, b3)


def init_params(key):
    """Deterministic init mimicking nn.Linear default (uniform +/- 1/sqrt(fan_in))."""
    def linear(key, fan_in, fan_out):
        kw, kb = jax.random.split(key)
        bound = 1.0 / jnp.sqrt(fan_in)
        # Stored as (in, out) so the kernel computes x @ W (== PyTorch x @ W.T).
        w = jax.random.uniform(kw, (fan_in, fan_out), jnp.float32, -bound, bound)
        b = jax.random.uniform(kb, (fan_out,), jnp.float32, -bound, bound)
        return w, b

    k1, k2, k3 = jax.random.split(key, 3)
    w1, b1 = linear(k1, IN_DIM, H1)
    w2, b2 = linear(k2, H1, H2)
    w3, b3 = linear(k3, H2, OUT_DIM)
    return w1, b1, w2, b2, w3, b3


def _ref_forward_f32(x, w1, b1, w2, b2, w3, b3):
    """Full-f32 reference == the PyTorch module's forward."""
    h1 = jnp.maximum(x @ w1 + b1, 0.0)
    h2 = jnp.maximum(h1 @ w2 + b2, 0.0)
    return jnp.tanh(h2 @ w3 + b3)


def _ref_forward_bf16(x, prepared):
    """Plain-JAX reference using the same bf16-input / f32-accumulate recipe."""
    w1, b1, w2, b2, w3, b3 = prepared
    bf = lambda a: a.astype(jnp.bfloat16)
    h1 = jnp.maximum(
        jnp.dot(bf(x), w1, preferred_element_type=jnp.float32) + b1, 0.0)
    h2 = jnp.maximum(
        jnp.dot(bf(h1), w2, preferred_element_type=jnp.float32) + b2, 0.0)
    return jnp.tanh(
        jnp.dot(bf(h2), w3, preferred_element_type=jnp.float32) + b3)


if __name__ == "__main__":
    key = jax.random.PRNGKey(0)
    kx, kp = jax.random.split(key)

    B = 64                                   # small demo batch
    x = jax.random.normal(kx, (B, IN_DIM), jnp.float32)
    raw_params = init_params(kp)
    params = prepare_params(*raw_params)     # one-time layout/bf16 conversion

    out = generater_forward(x, *params)
    jax.block_until_ready(out)
    assert out.shape == (B, OUT_DIM) and out.dtype == jnp.float32

    # Tight check vs a reference that uses the identical bf16-MXU recipe.
    ref_bf = _ref_forward_bf16(x, params)
    err_bf = float(jnp.max(jnp.abs(out - ref_bf)))
    assert jnp.allclose(out, ref_bf, atol=2e-2, rtol=2e-2), err_bf

    # Loose check vs the true f32 PyTorch-equivalent forward (bounds the
    # bf16-input deviation instead of hiding it).
    ref_f32 = _ref_forward_f32(x, *raw_params)
    err_f32 = float(jnp.max(jnp.abs(out - ref_f32)))
    assert err_f32 < 0.1, err_f32

    print("KERNEL_OK")
</pallas_src>

<mosaic_0001>
module attributes {stable_mosaic.version = 11 : i64} {
  func.func @_generater_kernel(%arg0: i32, %arg1: memref<64x100xf32, #tpu.memory_space<vmem>>, %arg2: memref<100x256xbf16, #tpu.memory_space<vmem>>, %arg3: memref<1x256xf32, #tpu.memory_space<vmem>>, %arg4: memref<256x256xbf16, #tpu.memory_space<vmem>>, %arg5: memref<1x256xf32, #tpu.memory_space<vmem>>, %arg6: memref<256x784xbf16, #tpu.memory_space<vmem>>, %arg7: memref<1x784xf32, #tpu.memory_space<vmem>>, %arg8: memref<64x784xf32, #tpu.memory_space<vmem>>) attributes {dimension_semantics = [#tpu.dimension_semantics<parallel>], iteration_bounds = array<i64: 1>, scalar_prefetch = 0 : i64, scratch_operands = 0 : i64, tpu.core_type = #tpu.core_type<tc>, window_params = [{transform_indices = @transform_0, window_bounds = array<i64: 64, 100>}, {pipeline_mode = #tpu.pipeline_mode<synchronous>, transform_indices = @transform_1, window_bounds = array<i64: 100, 256>}, {pipeline_mode = #tpu.pipeline_mode<synchronous>, transform_indices = @transform_2, window_bounds = array<i64: 1, 256>}, {pipeline_mode = #tpu.pipeline_mode<synchronous>, transform_indices = @transform_3, window_bounds = array<i64: 256, 256>}, {pipeline_mode = #tpu.pipeline_mode<synchronous>, transform_indices = @transform_4, window_bounds = array<i64: 1, 256>}, {pipeline_mode = #tpu.pipeline_mode<synchronous>, transform_indices = @transform_5, window_bounds = array<i64: 256, 784>}, {pipeline_mode = #tpu.pipeline_mode<synchronous>, transform_indices = @transform_6, window_bounds = array<i64: 1, 784>}, {transform_indices = @transform_7, window_bounds = array<i64: 64, 784>}]} {
    %c0 = arith.constant 0 : index
    %c0_0 = arith.constant 0 : index
    %0 = vector.load %arg1[%c0, %c0_0] : memref<64x100xf32, #tpu.memory_space<vmem>>, vector<64x100xf32>
    %1 = arith.truncf %0 : vector<64x100xf32> to vector<64x100xbf16>
    %c0_1 = arith.constant 0 : index
    %c0_2 = arith.constant 0 : index
    %2 = vector.load %arg2[%c0_1, %c0_2] : memref<100x256xbf16, #tpu.memory_space<vmem>>, vector<100x256xbf16>
    %cst = arith.constant dense<0.000000e+00> : vector<64x256xf32>
    %3 = tpu.matmul %1, %2, %cst {dimension_numbers = #tpu.dot_dimension_numbers<[1], [0], [0], [1], [0, 0, 1, 1], [], []>} : vector<64x100xbf16>, vector<100x256xbf16>, vector<64x256xf32> -> vector<64x256xf32>
    %c0_3 = arith.constant 0 : index
    %c0_4 = arith.constant 0 : index
    %4 = vector.load %arg3[%c0_3, %c0_4] : memref<1x256xf32, #tpu.memory_space<vmem>>, vector<1x256xf32>
    %5 = vector.broadcast %4 : vector<1x256xf32> to vector<64x256xf32>
    %6 = arith.addf %3, %5 : vector<64x256xf32>
    %cst_5 = arith.constant 0.000000e+00 : f32
    %7 = vector.broadcast %cst_5 : f32 to vector<64x256xf32>
    %8 = arith.maximumf %6, %7 : vector<64x256xf32>
    %9 = arith.truncf %8 : vector<64x256xf32> to vector<64x256xbf16>
    %c0_6 = arith.constant 0 : index
    %c0_7 = arith.constant 0 : index
    %10 = vector.load %arg4[%c0_6, %c0_7] : memref<256x256xbf16, #tpu.memory_space<vmem>>, vector<256x256xbf16>
    %cst_8 = arith.constant dense<0.000000e+00> : vector<64x256xf32>
    %11 = tpu.matmul %9, %10, %cst_8 {dimension_numbers = #tpu.dot_dimension_numbers<[1], [0], [0], [1], [0, 0, 1, 1], [], []>} : vector<64x256xbf16>, vector<256x256xbf16>, vector<64x256xf32> -> vector<64x256xf32>
    %c0_9 = arith.constant 0 : index
    %c0_10 = arith.constant 0 : index
    %12 = vector.load %arg5[%c0_9, %c0_10] : memref<1x256xf32, #tpu.memory_space<vmem>>, vector<1x256xf32>
    %13 = vector.broadcast %12 : vector<1x256xf32> to vector<64x256xf32>
    %14 = arith.addf %11, %13 : vector<64x256xf32>
    %cst_11 = arith.constant 0.000000e+00 : f32
    %15 = vector.broadcast %cst_11 : f32 to vector<64x256xf32>
    %16 = arith.maximumf %14, %15 : vector<64x256xf32>
    %17 = arith.truncf %16 : vector<64x256xf32> to vector<64x256xbf16>
    %c0_12 = arith.constant 0 : index
    %c0_13 = arith.constant 0 : index
    %18 = vector.load %arg6[%c0_12, %c0_13] : memref<256x784xbf16, #tpu.memory_space<vmem>>, vector<256x784xbf16>
    %cst_14 = arith.constant dense<0.000000e+00> : vector<64x784xf32>
    %19 = tpu.matmul %17, %18, %cst_14 {dimension_numbers = #tpu.dot_dimension_numbers<[1], [0], [0], [1], [0, 0, 1, 1], [], []>} : vector<64x256xbf16>, vector<256x784xbf16>, vector<64x784xf32> -> vector<64x784xf32>
    %c0_15 = arith.constant 0 : index
    %c0_16 = arith.constant 0 : index
    %20 = vector.load %arg7[%c0_15, %c0_16] : memref<1x784xf32, #tpu.memory_space<vmem>>, vector<1x784xf32>
    %21 = vector.broadcast %20 : vector<1x784xf32> to vector<64x784xf32>
    %22 = arith.addf %19, %21 : vector<64x784xf32>
    %23 = math.tanh %22 : vector<64x784xf32>
    %c0_17 = arith.constant 0 : index
    %c0_18 = arith.constant 0 : index
    %24 = vector.load %arg8[%c0_17, %c0_18] : memref<64x784xf32, #tpu.memory_space<vmem>>, vector<64x784xf32>
    tpu.vector_store %arg8[%c0_17, %c0_18], %23 {strides = array<i32>} : memref<64x784xf32, #tpu.memory_space<vmem>>, vector<64x784xf32>,
    return
  }
  func.func @transform_0(%arg0: i32) -> (i32, i32) {
    %c0_i32 = arith.constant 0 : i32
    %c0_i32_0 = arith.constant 0 : i32
    return %arg0, %c0_i32 : i32, i32
  }
  func.func @transform_1(%arg0: i32) -> (i32, i32) {
    %c0_i32 = arith.constant 0 : i32
    %c0_i32_0 = arith.constant 0 : i32
    %c0_i32_1 = arith.constant 0 : i32
    return %c0_i32, %c0_i32_0 : i32, i32
  }
  func.func @transform_2(%arg0: i32) -> (i32, i32) {
    %c0_i32 = arith.constant 0 : i32
    %c0_i32_0 = arith.constant 0 : i32
    %c0_i32_1 = arith.constant 0 : i32
    return %c0_i32, %c0_i32_0 : i32, i32
  }
  func.func @transform_3(%arg0: i32) -> (i32, i32) {
    %c0_i32 = arith.constant 0 : i32
    %c0_i32_0 = arith.constant 0 : i32
    %c0_i32_1 = arith.constant 0 : i32
    return %c0_i32, %c0_i32_0 : i32, i32
  }
  func.func @transform_4(%arg0: i32) -> (i32, i32) {
    %c0_i32 = arith.constant 0 : i32
    %c0_i32_0 = arith.constant 0 : i32
    %c0_i32_1 = arith.constant 0 : i32
    return %c0_i32, %c0_i32_0 : i32, i32
  }
  func.func @transform_5(%arg0: i32) -> (i32, i32) {
    %c0_i32 = arith.constant 0 : i32
    %c0_i32_0 = arith.constant 0 : i32
    %c0_i32_1 = arith.constant 0 : i32
    return %c0_i32, %c0_i32_0 : i32, i32
  }
  func.func @transform_6(%arg0: i32) -> (i32, i32) {
    %c0_i32 = arith.constant 0 : i32
    %c0_i32_0 = arith.constant 0 : i32
    %c0_i32_1 = arith.constant 0 : i32
    return %c0_i32, %c0_i32_0 : i32, i32
  }
  func.func @transform_7(%arg0: i32) -> (i32, i32) {
    %c0_i32 = arith.constant 0 : i32
    %c0_i32_0 = arith.constant 0 : i32
    return %arg0, %c0_i32 : i32, i32
  }
}

</mosaic_0001>

<llo_original>
// kernel: generater_forward.1
$region0: #{generater_forward.1}
  #allocation0 [shape = 'u32[]', space=smem, size = 0x4, offset = 0x4, fixed_abs, tag = 'smem constant byte address 0x4 - core index']
  #allocation1 [shape = 'u32[144,128]{1,0:T(1,128)}', space=vmem, size = 0x12000, scoped, tag = 'internal scratch']
  %s0 = inlined_call_operand.vmem [shape: f32[64,100], index: 0, kind: input, shape index: {}]
  %s1 = inlined_call_operand.vmem [shape: bf16[100,256], index: 1, kind: input, shape index: {}]
  %s2 = inlined_call_operand.vmem [shape: f32[1,256], index: 2, kind: input, shape index: {}]
  %s3 = inlined_call_operand.vmem [shape: bf16[256,256], index: 3, kind: input, shape index: {}]
  %s4 = inlined_call_operand.vmem [shape: f32[1,256], index: 4, kind: input, shape index: {}]
  %s5 = inlined_call_operand.vmem [shape: bf16[256,784], index: 5, kind: input, shape index: {}]
  %s6 = inlined_call_operand.vmem [shape: f32[1,784], index: 6, kind: input, shape index: {}]
  %s7 = inlined_call_operand.hbm [shape: f32[64,784], index: 7, kind: output, shape index: {}]
  %s8 = sld [smem:[#allocation0]]
  $region38: #{generater_forward.1} parent=0
    _
  %s10 = ssub.s32 1, %s8
  %s11 = scalar_select 0, %s10, %s8
  $region1: #{generater_forward.1} parent=0
    #allocation2 [shape = 'u8[229376]{0}', space=vmem, size = 0x38000, scoped, tag = 'output window, operand 0, single buffered']
    #allocation3 [shape = 's32[1]{0}', space=sflag, size = 0x4, scoped, tag = 'scoped memory for generater_forward.1']
    %12 = vsyncpa [#allocation3], 0
    // Predicated region
    $region2: #{generater_forward.1} parent=1 // pred_check
      _
    $region3: #{generater_forward.1} parent=1 // pred_check_branch
      %14 = sbr.rel (0) target = $region5
    $region4: #{generater_forward.1} parent=1 // pred_region
      _
    $region5: #{generater_forward.1} parent=1 // pred_fallthru
      _
    // Predicated region
    $region6: #{generater_forward.1} parent=1 // pred_check
      _
    $region7: #{generater_forward.1} parent=1 // pred_check_branch
      %16 = sbr.rel (0) target = $region9
    $region8: #{generater_forward.1} parent=1 // pred_region
      _
    $region9: #{generater_forward.1} parent=1 // pred_fallthru
      _
    // Predicated region
    $region10: #{generater_forward.1} parent=1 // pred_check
      _
    $region11: #{generater_forward.1} parent=1 // pred_check_branch
      %18 = sbr.rel (0) target = $region13
    $region12: #{generater_forward.1} parent=1 // pred_region
      _
    $region13: #{generater_forward.1} parent=1 // pred_fallthru
      _
    // Predicated region
    $region14: #{generater_forward.1} parent=1 // pred_check
      _
    $region15: #{generater_forward.1} parent=1 // pred_check_branch
      %20 = sbr.rel (0) target = $region17
    $region16: #{generater_forward.1} parent=1 // pred_region
      _
    $region17: #{generater_forward.1} parent=1 // pred_fallthru
      _
    // Predicated region
    $region18: #{generater_forward.1} parent=1 // pred_check
      _
    $region19: #{generater_forward.1} parent=1 // pred_check_branch
      %22 = sbr.rel (0) target = $region21
    $region20: #{generater_forward.1} parent=1 // pred_region
      _
    $region21: #{generater_forward.1} parent=1 // pred_fallthru
      _
    // Predicated region
    $region22: #{generater_forward.1} parent=1 // pred_check
      _
    $region23: #{generater_forward.1} parent=1 // pred_check_branch
      %24 = sbr.rel (0) target = $region25
    $region24: #{generater_forward.1} parent=1 // pred_region
      _
    $region25: #{generater_forward.1} parent=1 // pred_fallthru
      _
    // Predicated region
    $region26: #{generater_forward.1} parent=1 // pred_check
      _
    $region27: #{generater_forward.1} parent=1 // pred_check_branch
      %26 = sbr.rel (0) target = $region29
    $region28: #{generater_forward.1} parent=1 // pred_region
      _
    $region29: #{generater_forward.1} parent=1 // pred_fallthru
      _
    %v28 = vld [vmem:[%s0] sm:$0xff]
    %v29 = vld [vmem:[%s0 + $0x8] sm:$0xff]
    %v30 = vld [vmem:[%s0 + $0x10] sm:$0xff]
    %v31 = vld [vmem:[%s0 + $0x18] sm:$0xff]
    %v32 = vld [vmem:[%s0 + $0x20] sm:$0xff]
    %v33 = vld [vmem:[%s0 + $0x28] sm:$0xff]
    %v34 = vld [vmem:[%s0 + $0x30] sm:$0xff]
    %v35 = vld [vmem:[%s0 + $0x38] sm:$0xff]
    %v36 = vpack.c.bf16 %v29, %v28
    %v37 = vpack.c.bf16 %v31, %v30
    %v38 = vpack.c.bf16 %v33, %v32
    %v39 = vpack.c.bf16 %v35, %v34
    %v40 = vld [vmem:[%s1] sm:$0xff]
    %v41 = vld [vmem:[%s1 + $0x8] sm:$0xff]
    %v42 = vld [vmem:[%s1 + $0x10] sm:$0xff]
    %v43 = vld [vmem:[%s1 + $0x18] sm:$0xff]
    %v44 = vld [vmem:[%s1 + $0x20] sm:$0xff]
    %v45 = vld [vmem:[%s1 + $0x28] sm:$0xff]
    %v46 = vld [vmem:[%s1 + $0x30] sm:$0xff]
    %v47 = vld [vmem:[%s1 + $0x38] sm:$0xff]
    %v48 = vld [vmem:[%s1 + $0x40] sm:$0xff]
    %v49 = vld [vmem:[%s1 + $0x48] sm:$0xff]
    %v50 = vld [vmem:[%s1 + $0x50] sm:$0xff]
    %v51 = vld [vmem:[%s1 + $0x58] sm:$0xff]
    %v52 = vld [vmem:[%s1 + $0x60] sm:$0x33]
    %v53 = vld [vmem:[%s2] sm:$0x3]
    %v55 = vlaneseq
    %v56 = vshrl.u32 %v55, 7
    %v57 = vsub.s32 0, %v56
    %v58 = vrot.slane %v53, %v57
    %v59 = vlaneseq
    %v60 = vshrl.u32 %v59, 7
    %v61 = vsub.s32 1, %v60
    %v62 = vrot.slane %v53, %v61
    %v78 = vunpack.c.l.b16 %v40
    %v79 = vunpack.c.h.b16 %v40
    %v80 = vunpack.c.l.b16 %v41
    %v81 = vunpack.c.h.b16 %v41
    %v82 = vunpack.c.l.b16 %v42
    %v83 = vunpack.c.h.b16 %v42
    %v84 = vunpack.c.l.b16 %v43
    %v85 = vunpack.c.h.b16 %v43
    %v86 = vunpack.c.l.b16 %v44
    %v87 = vunpack.c.h.b16 %v44
    %v88 = vunpack.c.l.b16 %v45
    %v89 = vunpack.c.h.b16 %v45
    %v90 = vunpack.c.l.b16 %v46
    %v91 = vunpack.c.h.b16 %v46
    %v92 = vunpack.c.l.b16 %v47
    %v93 = vunpack.c.h.b16 %v47
    %v94 = vunpack.c.l.b16 %v48
    %v95 = vunpack.c.h.b16 %v48
    %v96 = vunpack.c.l.b16 %v49
    %v97 = vunpack.c.h.b16 %v49
    %v98 = vunpack.c.l.b16 %v50
    %v99 = vunpack.c.h.b16 %v50
    %v100 = vunpack.c.l.b16 %v51
    %v101 = vunpack.c.h.b16 %v51
    %v102 = vunpack.c.l.b16 %v52
    %v103 = vunpack.c.h.b16 %v52
    %v104 = vpack.c.b16 %v80, %v78
    %v105 = vpack.c.b16 %v81, %v79
    %v106 = vpack.c.b16 %v84, %v82
    %v107 = vpack.c.b16 %v85, %v83
    %v108 = vpack.c.b16 %v88, %v86
    %v109 = vpack.c.b16 %v89, %v87
    %v110 = vpack.c.b16 %v92, %v90
    %v111 = vpack.c.b16 %v93, %v91
    %v112 = vpack.c.b16 %v96, %v94
    %v113 = vpack.c.b16 %v97, %v95
    %v114 = vpack.c.b16 %v100, %v98
    %v115 = vpack.c.b16 %v101, %v99
    %v116 = vpack.c.b16 %v102, %v102
    %v117 = vpack.c.b16 %v103, %v103
    %vm130 = vcmask 818176
    %v132 = vsel %vm130, %v36, 0
    %v135 = vsel %vm130, %v37, 0
    %v138 = vsel %vm130, %v38, 0
    %v141 = vsel %vm130, %v39, 0
    %vm143 = vcmask 1041408
    %v145 = vsel %vm143, %v116, 0
    %v148 = vsel %vm143, %v117, 0
    %150 = vmatprep.subr.bf16.mxu0 0
    %151 = vmatpush1.bf16.msra.mxu0 0
    %152 = vmatprep.subr.bf16.mxu0 %v148
    %153 = vmatpush1.bf16.msra.mxu0 %v145
    %154 = vmatprep.subr.bf16.mxu0 %v115
    %155 = vmatpush1.bf16.msra.mxu0 %v114
    %156 = vmatprep.subr.bf16.mxu0 %v113
    %157 = vmatpush1.bf16.msra.mxu0 %v112
    %158 = vmatprep.subr.bf16.mxu0 %v111
    %159 = vmatpush1.bf16.msra.mxu0 %v110
    %160 = vmatprep.subr.bf16.mxu0 %v109
    %161 = vmatpush1.bf16.msra.mxu0 %v108
    %162 = vmatprep.subr.bf16.mxu0 %v107
    %163 = vmatpush1.bf16.msra.mxu0 %v106
    %164 = vmatprep.subr.bf16.mxu0 %v105
    %165 = vmatpush1.bf16.msra.mxu0 %v104
    %166 = vmatprep.subr.bf16.mxu0 0
    %167 = vmatpush2.bf16.msra.mxu0 0
    %168 = vmatprep.subr.bf16.mxu0 0
    %169 = vmatpush2.bf16.msra.mxu0 0
    %170 = vmatprep.subr.bf16.mxu0 0
    %171 = vmatpush2.bf16.msra.mxu0 0
    %172 = vmatprep.subr.bf16.mxu0 0
    %173 = vmatpush2.bf16.msra.mxu0 0
    %174 = vmatprep.subr.bf16.mxu0 0
    %175 = vmatpush2.bf16.msra.mxu0 0
    %176 = vmatprep.subr.bf16.mxu0 0
    %177 = vmatpush2.bf16.msra.mxu0 0
    %178 = vmatprep.subr.bf16.mxu0 0
    %179 = vmatpush2.bf16.msra.mxu0 0
    %180 = vmatprep.subr.bf16.mxu0 0
    %181 = vmatpush2.bf16.msra.mxu0 0
    %182 = vmatprep.mubr.bf16.mxu0 0
    %183 = vmatmul.mubr.bf16.gmra.mxu0 %v132
    %v184 = vpop.f32.mrf.mxu0
    %v185 = vadd.f32 %v58, %v184
    %v186 = vpop.f32.mrf.mxu0
    %v187 = vadd.f32 %v62, %v186
    %v188 = vpop.f32.mrf.mxu0
    %v189 = vadd.f32 %v58, %v188
    %v190 = vpop.f32.mrf.mxu0
    %v191 = vadd.f32 %v62, %v190
    %192 = vmatprep.mubr.bf16.mxu0 0
    %193 = vmatmul.mubr.bf16.gmra.mxu0 %v135
    %v194 = vpop.f32.mrf.mxu0
    %v195 = vadd.f32 %v58, %v194
    %v196 = vpop.f32.mrf.mxu0
    %v197 = vadd.f32 %v62, %v196
    %v198 = vpop.f32.mrf.mxu0
    %v199 = vadd.f32 %v58, %v198
    %v200 = vpop.f32.mrf.mxu0
    %v201 = vadd.f32 %v62, %v200
    %202 = vmatprep.mubr.bf16.mxu0 0
    %203 = vmatmul.mubr.bf16.gmra.mxu0 %v138
    %v204 = vpop.f32.mrf.mxu0
    %v205 = vadd.f32 %v58, %v204
    %v206 = vpop.f32.mrf.mxu0
    %v207 = vadd.f32 %v62, %v206
    %v208 = vpop.f32.mrf.mxu0
    %v209 = vadd.f32 %v58, %v208
    %v210 = vpop.f32.mrf.mxu0
    %v211 = vadd.f32 %v62, %v210
    %212 = vmatprep.mubr.bf16.mxu0 0
    %213 = vmatmul.mubr.bf16.gmra.mxu0 %v141
    %v214 = vpop.f32.mrf.mxu0
    %v215 = vadd.f32 %v58, %v214
    %v216 = vpop.f32.mrf.mxu0
    %v217 = vadd.f32 %v62, %v216
    %v218 = vpop.f32.mrf.mxu0
    %v219 = vadd.f32 %v58, %v218
    %v220 = vpop.f32.mrf.mxu0
    %v221 = vadd.f32 %v62, %v220
    %222 = vdwg.mxu0
    %v223 = vmax.f32 %v185, 0.0
    %v224 = vmax.f32 %v187, 0.0
    %v225 = vmax.f32 %v189, 0.0
    %v226 = vmax.f32 %v191, 0.0
    %v227 = vmax.f32 %v195, 0.0
    %v228 = vmax.f32 %v197, 0.0
    %v229 = vmax.f32 %v199, 0.0
    %v230 = vmax.f32 %v201, 0.0
    %v231 = vmax.f32 %v205, 0.0
    %v232 = vmax.f32 %v207, 0.0
    %v233 = vmax.f32 %v209, 0.0
    %v234 = vmax.f32 %v211, 0.0
    %v235 = vmax.f32 %v215, 0.0
    %v236 = vmax.f32 %v217, 0.0
    %v237 = vmax.f32 %v219, 0.0
    %v238 = vmax.f32 %v221, 0.0
    %v239 = vpack.c.bf16 %v225, %v223
    %v240 = vpack.c.bf16 %v226, %v224
    %v241 = vpack.c.bf16 %v229, %v227
    %v242 = vpack.c.bf16 %v230, %v228
    %v243 = vpack.c.bf16 %v233, %v231
    %v244 = vpack.c.bf16 %v234, %v232
    %v245 = vpack.c.bf16 %v237, %v235
    %v246 = vpack.c.bf16 %v238, %v236
    %v247 = vld [vmem:[%s3] sm:$0xff]
    %v248 = vld [vmem:[%s3 + $0x8] sm:$0xff]
    %v249 = vld [vmem:[%s3 + $0x10] sm:$0xff]
    %v250 = vld [vmem:[%s3 + $0x18] sm:$0xff]
    %v251 = vld [vmem:[%s3 + $0x20] sm:$0xff]
    %v252 = vld [vmem:[%s3 + $0x28] sm:$0xff]
    %v253 = vld [vmem:[%s3 + $0x30] sm:$0xff]
    %v254 = vld [vmem:[%s3 + $0x38] sm:$0xff]
    %v255 = vld [vmem:[%s3 + $0x40] sm:$0xff]
    %v256 = vld [vmem:[%s3 + $0x48] sm:$0xff]
    %v257 = vld [vmem:[%s3 + $0x50] sm:$0xff]
    %v258 = vld [vmem:[%s3 + $0x58] sm:$0xff]
    %v259 = vld [vmem:[%s3 + $0x60] sm:$0xff]
    %v260 = vld [vmem:[%s3 + $0x68] sm:$0xff]
    %v261 = vld [vmem:[%s3 + $0x70] sm:$0xff]
    %v262 = vld [vmem:[%s3 + $0x78] sm:$0xff]
    %v263 = vld [vmem:[%s3 + $0x80] sm:$0xff]
    %v264 = vld [vmem:[%s3 + $0x88] sm:$0xff]
    %v265 = vld [vmem:[%s3 + $0x90] sm:$0xff]
    %v266 = vld [vmem:[%s3 + $0x98] sm:$0xff]
    %v267 = vld [vmem:[%s3 + $0xa0] sm:$0xff]
    %v268 = vld [vmem:[%s3 + $0xa8] sm:$0xff]
    %v269 = vld [vmem:[%s3 + $0xb0] sm:$0xff]
    %v270 = vld [vmem:[%s3 + $0xb8] sm:$0xff]
    %v271 = vld [vmem:[%s3 + $0xc0] sm:$0xff]
    %v272 = vld [vmem:[%s3 + $0xc8] sm:$0xff]
    %v273 = vld [vmem:[%s3 + $0xd0] sm:$0xff]
    %v274 = vld [vmem:[%s3 + $0xd8] sm:$0xff]
    %v275 = vld [vmem:[%s3 + $0xe0] sm:$0xff]
    %v276 = vld [vmem:[%s3 + $0xe8] sm:$0xff]
    %v277 = vld [vmem:[%s3 + $0xf0] sm:$0xff]
    %v278 = vld [vmem:[%s3 + $0xf8] sm:$0xff]
    %v279 = vld [vmem:[%s4] sm:$0x3]
    %v281 = vlaneseq
    %v282 = vshrl.u32 %v281, 7
    %v283 = vsub.s32 0, %v282
    %v284 = vrot.slane %v279, %v283
    %v285 = vlaneseq
    %v286 = vshrl.u32 %v285, 7
    %v287 = vsub.s32 1, %v286
    %v288 = vrot.slane %v279, %v287
    %v323 = vunpack.c.l.b16 %v247
    %v324 = vunpack.c.h.b16 %v247
    %v325 = vunpack.c.l.b16 %v248
    %v326 = vunpack.c.h.b16 %v248
    %v327 = vunpack.c.l.b16 %v249
    %v328 = vunpack.c.h.b16 %v249
    %v329 = vunpack.c.l.b16 %v250
    %v330 = vunpack.c.h.b16 %v250
    %v331 = vunpack.c.l.b16 %v251
    %v332 = vunpack.c.h.b16 %v251
    %v333 = vunpack.c.l.b16 %v252
    %v334 = vunpack.c.h.b16 %v252
    %v335 = vunpack.c.l.b16 %v253
    %v336 = vunpack.c.h.b16 %v253
    %v337 = vunpack.c.l.b16 %v254
    %v338 = vunpack.c.h.b16 %v254
    %v339 = vunpack.c.l.b16 %v255
    %v340 = vunpack.c.h.b16 %v255
    %v341 = vunpack.c.l.b16 %v256
    %v342 = vunpack.c.h.b16 %v256
    %v343 = vunpack.c.l.b16 %v257
    %v344 = vunpack.c.h.b16 %v257
    %v345 = vunpack.c.l.b16 %v258
    %v346 = vunpack.c.h.b16 %v258
    %v347 = vunpack.c.l.b16 %v259
    %v348 = vunpack.c.h.b16 %v259
    %v349 = vunpack.c.l.b16 %v260
    %v350 = vunpack.c.h.b16 %v260
    %v351 = vunpack.c.l.b16 %v261
    %v352 = vunpack.c.h.b16 %v261
    %v353 = vunpack.c.l.b16 %v262
    %v354 = vunpack.c.h.b16 %v262
    %v355 = vunpack.c.l.b16 %v263
    %v356 = vunpack.c.h.b16 %v263
    %v357 = vunpack.c.l.b16 %v264
    %v358 = vunpack.c.h.b16 %v264
    %v359 = vunpack.c.l.b16 %v265
    %v360 = vunpack.c.h.b16 %v265
    %v361 = vunpack.c.l.b16 %v266
    %v362 = vunpack.c.h.b16 %v266
    %v363 = vunpack.c.l.b16 %v267
    %v364 = vunpack.c.h.b16 %v267
    %v365 = vunpack.c.l.b16 %v268
    %v366 = vunpack.c.h.b16 %v268
    %v367 = vunpack.c.l.b16 %v269
    %v368 = vunpack.c.h.b16 %v269
    %v369 = vunpack.c.l.b16 %v270
    %v370 = vunpack.c.h.b16 %v270
    %v371 = vunpack.c.l.b16 %v271
    %v372 = vunpack.c.h.b16 %v271
    %v373 = vunpack.c.l.b16 %v272
    %v374 = vunpack.c.h.b16 %v272
    %v375 = vunpack.c.l.b16 %v273
    %v376 = vunpack.c.h.b16 %v273
    %v377 = vunpack.c.l.b16 %v274
    %v378 = vunpack.c.h.b16 %v274
    %v379 = vunpack.c.l.b16 %v275
    %v380 = vunpack.c.h.b16 %v275
    %v381 = vunpack.c.l.b16 %v276
    %v382 = vunpack.c.h.b16 %v276
    %v383 = vunpack.c.l.b16 %v277
    %v384 = vunpack.c.h.b16 %v277
    %v385 = vunpack.c.l.b16 %v278
    %v386 = vunpack.c.h.b16 %v278
    %v387 = vpack.c.b16 %v325, %v323
    %v388 = vpack.c.b16 %v326, %v324
    %v389 = vpack.c.b16 %v329, %v327
    %v390 = vpack.c.b16 %v330, %v328
    %v391 = vpack.c.b16 %v333, %v331
    %v392 = vpack.c.b16 %v334, %v332
    %v393 = vpack.c.b16 %v337, %v335
    %v394 = vpack.c.b16 %v338, %v336
    %v395 = vpack.c.b16 %v341, %v339
    %v396 = vpack.c.b16 %v342, %v340
    %v397 = vpack.c.b16 %v345, %v343
    %v398 = vpack.c.b16 %v346, %v344
    %v399 = vpack.c.b16 %v349, %v347
    %v400 = vpack.c.b16 %v350, %v348
    %v401 = vpack.c.b16 %v353, %v351
    %v402 = vpack.c.b16 %v354, %v352
    %v403 = vpack.c.b16 %v357, %v355
    %v404 = vpack.c.b16 %v358, %v356
    %v405 = vpack.c.b16 %v361, %v359
    %v406 = vpack.c.b16 %v362, %v360
    %v407 = vpack.c.b16 %v365, %v363
    %v408 = vpack.c.b16 %v366, %v364
    %v409 = vpack.c.b16 %v369, %v367
    %v410 = vpack.c.b16 %v370, %v368
    %v411 = vpack.c.b16 %v373, %v371
    %v412 = vpack.c.b16 %v374, %v372
    %v413 = vpack.c.b16 %v377, %v375
    %v414 = vpack.c.b16 %v378, %v376
    %v415 = vpack.c.b16 %v381, %v379
    %v416 = vpack.c.b16 %v382, %v380
    %v417 = vpack.c.b16 %v385, %v383
    %v418 = vpack.c.b16 %v386, %v384
    %451 = vmatprep.subr.bf16.mxu0 %v402
    %452 = vmatpush1.bf16.msra.mxu0 %v401
    %453 = vmatprep.subr.bf16.mxu0 %v400
    %454 = vmatpush1.bf16.msra.mxu0 %v399
    %455 = vmatprep.subr.bf16.mxu0 %v398
    %456 = vmatpush1.bf16.msra.mxu0 %v397
    %457 = vmatprep.subr.bf16.mxu0 %v396
    %458 = vmatpush1.bf16.msra.mxu0 %v395
    %459 = vmatprep.subr.bf16.mxu0 %v394
    %460 = vmatpush1.bf16.msra.mxu0 %v393
    %461 = vmatprep.subr.bf16.mxu0 %v392
    %462 = vmatpush1.bf16.msra.mxu0 %v391
    %463 = vmatprep.subr.bf16.mxu0 %v390
    %464 = vmatpush1.bf16.msra.mxu0 %v389
    %465 = vmatprep.subr.bf16.mxu0 %v388
    %466 = vmatpush1.bf16.msra.mxu0 %v387
    %467 = vmatprep.subr.bf16.mxu0 %v418
    %468 = vmatpush2.bf16.msra.mxu0 %v417
    %469 = vmatprep.subr.bf16.mxu0 %v416
    %470 = vmatpush2.bf16.msra.mxu0 %v415
    %471 = vmatprep.subr.bf16.mxu0 %v414
    %472 = vmatpush2.bf16.msra.mxu0 %v413
    %473 = vmatprep.subr.bf16.mxu0 %v412
    %474 = vmatpush2.bf16.msra.mxu0 %v411
    %475 = vmatprep.subr.bf16.mxu0 %v410
    %476 = vmatpush2.bf16.msra.mxu0 %v409
    %477 = vmatprep.subr.bf16.mxu0 %v408
    %478 = vmatpush2.bf16.msra.mxu0 %v407
    %479 = vmatprep.subr.bf16.mxu0 %v406
    %480 = vmatpush2.bf16.msra.mxu0 %v405
    %481 = vmatprep.subr.bf16.mxu0 %v404
    %482 = vmatpush2.bf16.msra.mxu0 %v403
    %483 = vmatprep.mubr.bf16.mxu0 %v240
    %484 = vmatmul.mubr.bf16.gmra.mxu0 %v239
    %v485 = vpop.f32.mrf.mxu0
    %v486 = vadd.f32 %v284, %v485
    %v487 = vpop.f32.mrf.mxu0
    %v488 = vadd.f32 %v288, %v487
    %v489 = vpop.f32.mrf.mxu0
    %v490 = vadd.f32 %v284, %v489
    %v491 = vpop.f32.mrf.mxu0
    %v492 = vadd.f32 %v288, %v491
    %493 = vmatprep.mubr.bf16.mxu0 %v242
    %494 = vmatmul.mubr.bf16.gmra.mxu0 %v241
    %v495 = vpop.f32.mrf.mxu0
    %v496 = vadd.f32 %v284, %v495
    %v497 = vpop.f32.mrf.mxu0
    %v498 = vadd.f32 %v288, %v497
    %v499 = vpop.f32.mrf.mxu0
    %v500 = vadd.f32 %v284, %v499
    %v501 = vpop.f32.mrf.mxu0
    %v502 = vadd.f32 %v288, %v501
    %503 = vmatprep.mubr.bf16.mxu0 %v244
    %504 = vmatmul.mubr.bf16.gmra.mxu0 %v243
    %v505 = vpop.f32.mrf.mxu0
    %v506 = vadd.f32 %v284, %v505
    %v507 = vpop.f32.mrf.mxu0
    %v508 = vadd.f32 %v288, %v507
    %v509 = vpop.f32.mrf.mxu0
    %v510 = vadd.f32 %v284, %v509
    %v511 = vpop.f32.mrf.mxu0
    %v512 = vadd.f32 %v288, %v511
    %513 = vmatprep.mubr.bf16.mxu0 %v246
    %514 = vmatmul.mubr.bf16.gmra.mxu0 %v245
    %v515 = vpop.f32.mrf.mxu0
    %v516 = vadd.f32 %v284, %v515
    %v517 = vpop.f32.mrf.mxu0
    %v518 = vadd.f32 %v288, %v517
    %v519 = vpop.f32.mrf.mxu0
    %v520 = vadd.f32 %v284, %v519
    %v521 = vpop.f32.mrf.mxu0
    %v522 = vadd.f32 %v288, %v521
    %523 = vdwg.mxu0
    %v524 = vmax.f32 %v486, 0.0
    %v525 = vmax.f32 %v488, 0.0
    %v526 = vmax.f32 %v490, 0.0
    %v527 = vmax.f32 %v492, 0.0
    %v528 = vmax.f32 %v496, 0.0
    %v529 = vmax.f32 %v498, 0.0
    %v530 = vmax.f32 %v500, 0.0
    %v531 = vmax.f32 %v502, 0.0
    %v532 = vmax.f32 %v506, 0.0
    %v533 = vmax.f32 %v508, 0.0
    %v534 = vmax.f32 %v510, 0.0
    %v535 = vmax.f32 %v512, 0.0
    %v536 = vmax.f32 %v516, 0.0
    %v537 = vmax.f32 %v518, 0.0
    %v538 = vmax.f32 %v520, 0.0
    %v539 = vmax.f32 %v522, 0.0
    %v540 = vpack.c.bf16 %v526, %v524
    %v541 = vpack.c.bf16 %v527, %v525
    %v542 = vpack.c.bf16 %v530, %v528
    %v543 = vpack.c.bf16 %v531, %v529
    %v544 = vpack.c.bf16 %v534, %v532
    %v545 = vpack.c.bf16 %v535, %v533
    %v546 = vpack.c.bf16 %v538, %v536
    %v547 = vpack.c.bf16 %v539, %v537
    %v548 = vld [vmem:[%s5] sm:$0xff]
    %v549 = vld [vmem:[%s5 + $0x8] sm:$0xff]
    %v550 = vld [vmem:[%s5 + $0x10] sm:$0xff]
    %v551 = vld [vmem:[%s5 + $0x18] sm:$0xf]
    %v552 = vld [vmem:[%s5 + $0x1c] sm:$0xff]
    %v553 = vld [vmem:[%s5 + $0x24] sm:$0xff]
    %v554 = vld [vmem:[%s5 + $0x2c] sm:$0xff]
    %v555 = vld [vmem:[%s5 + $0x34] sm:$0xf]
    %v556 = vld [vmem:[%s5 + $0x38] sm:$0xff]
    %v557 = vld [vmem:[%s5 + $0x40] sm:$0xff]
    %v558 = vld [vmem:[%s5 + $0x48] sm:$0xff]
    %v559 = vld [vmem:[%s5 + $0x50] sm:$0xf]
    %v560 = vld [vmem:[%s5 + $0x54] sm:$0xff]
    %v561 = vld [vmem:[%s5 + $0x5c] sm:$0xff]
    %v562 = vld [vmem:[%s5 + $0x64] sm:$0xff]
    %v563 = vld [vmem:[%s5 + $0x6c] sm:$0xf]
    %v564 = vld [vmem:[%s5 + $0x70] sm:$0xff]
    %v565 = vld [vmem:[%s5 + $0x78] sm:$0xff]
    %v566 = vld [vmem:[%s5 + $0x80] sm:$0xff]
    %v567 = vld [vmem:[%s5 + $0x88] sm:$0xf]
    %v568 = vld [vmem:[%s5 + $0x8c] sm:$0xff]
    %v569 = vld [vmem:[%s5 + $0x94] sm:$0xff]
    %v570 = vld [vmem:[%s5 + $0x9c] sm:$0xff]
    %v571 = vld [vmem:[%s5 + $0xa4] sm:$0xf]
    %v572 = vld [vmem:[%s5 + $0xa8] sm:$0xff]
    %v573 = vld [vmem:[%s5 + $0xb0] sm:$0xff]
    %v574 = vld [vmem:[%s5 + $0xb8] sm:$0xff]
    %v575 = vld [vmem:[%s5 + $0xc0] sm:$0xf]
    %v576 = vld [vmem:[%s5 + $0xc4] sm:$0xff]
    %v577 = vld [vmem:[%s5 + $0xcc] sm:$0xff]
    %v578 = vld [vmem:[%s5 + $0xd4] sm:$0xff]
    %v579 = vld [vmem:[%s5 + $0xdc] sm:$0xf]
    %v580 = vld [vmem:[%s5 + $0xe0] sm:$0xff]
    %v581 = vld [vmem:[%s5 + $0xe8] sm:$0xff]
    %v582 = vld [vmem:[%s5 + $0xf0] sm:$0xff]
    %v583 = vld [vmem:[%s5 + $0xf8] sm:$0xf]
    %v584 = vld [vmem:[%s5 + $0xfc] sm:$0xff]
    %v585 = vld [vmem:[%s5 + $0x104] sm:$0xff]
    %v586 = vld [vmem:[%s5 + $0x10c] sm:$0xff]
    %v587 = vld [vmem:[%s5 + $0x114] sm:$0xf]
    %v588 = vld [vmem:[%s5 + $0x118] sm:$0xff]
    %v589 = vld [vmem:[%s5 + $0x120] sm:$0xff]
    %v590 = vld [vmem:[%s5 + $0x128] sm:$0xff]
    %v591 = vld [vmem:[%s5 + $0x130] sm:$0xf]
    %v592 = vld [vmem:[%s5 + $0x134] sm:$0xff]
    %v593 = vld [vmem:[%s5 + $0x13c] sm:$0xff]
    %v594 = vld [vmem:[%s5 + $0x144] sm:$0xff]
    %v595 = vld [vmem:[%s5 + $0x14c] sm:$0xf]
    %v596 = vld [vmem:[%s5 + $0x150] sm:$0xff]
    %v597 = vld [vmem:[%s5 + $0x158] sm:$0xff]
    %v598 = vld [vmem:[%s5 + $0x160] sm:$0xff]
    %v599 = vld [vmem:[%s5 + $0x168] sm:$0xf]
    %v600 = vld [vmem:[%s5 + $0x16c] sm:$0xff]
    %v601 = vld [vmem:[%s5 + $0x174] sm:$0xff]
    %v602 = vld [vmem:[%s5 + $0x17c] sm:$0xff]
    %v603 = vld [vmem:[%s5 + $0x184] sm:$0xf]
    %v604 = vld [vmem:[%s5 + $0x188] sm:$0xff]
    %v605 = vld [vmem:[%s5 + $0x190] sm:$0xff]
    %v606 = vld [vmem:[%s5 + $0x198] sm:$0xff]
    %v607 = vld [vmem:[%s5 + $0x1a0] sm:$0xf]
    %v608 = vld [vmem:[%s5 + $0x1a4] sm:$0xff]
    %v609 = vld [vmem:[%s5 + $0x1ac] sm:$0xff]
    %v610 = vld [vmem:[%s5 + $0x1b4] sm:$0xff]
    %v611 = vld [vmem:[%s5 + $0x1bc] sm:$0xf]
    %v612 = vld [vmem:[%s5 + $0x1c0] sm:$0xff]
    %v613 = vld [vmem:[%s5 + $0x1c8] sm:$0xff]
    %v614 = vld [vmem:[%s5 + $0x1d0] sm:$0xff]
    %v615 = vld [vmem:[%s5 + $0x1d8] sm:$0xf]
    %v616 = vld [vmem:[%s5 + $0x1dc] sm:$0xff]
    %v617 = vld [vmem:[%s5 + $0x1e4] sm:$0xff]
    %v618 = vld [vmem:[%s5 + $0x1ec] sm:$0xff]
    %v619 = vld [vmem:[%s5 + $0x1f4] sm:$0xf]
    %v620 = vld [vmem:[%s5 + $0x1f8] sm:$0xff]
    %v621 = vld [vmem:[%s5 + $0x200] sm:$0xff]
    %v622 = vld [vmem:[%s5 + $0x208] sm:$0xff]
    %v623 = vld [vmem:[%s5 + $0x210] sm:$0xf]
    %v624 = vld [vmem:[%s5 + $0x214] sm:$0xff]
    %v625 = vld [vmem:[%s5 + $0x21c] sm:$0xff]
    %v626 = vld [vmem:[%s5 + $0x224] sm:$0xff]
    %v627 = vld [vmem:[%s5 + $0x22c] sm:$0xf]
    %v628 = vld [vmem:[%s5 + $0x230] sm:$0xff]
    %v629 = vld [vmem:[%s5 + $0x238] sm:$0xff]
    %v630 = vld [vmem:[%s5 + $0x240] sm:$0xff]
    %v631 = vld [vmem:[%s5 + $0x248] sm:$0xf]
    %v632 = vld [vmem:[%s5 + $0x24c] sm:$0xff]
    %v633 = vld [vmem:[%s5 + $0x254] sm:$0xff]
    %v634 = vld [vmem:[%s5 + $0x25c] sm:$0xff]
    %v635 = vld [vmem:[%s5 + $0x264] sm:$0xf]
    %v636 = vld [vmem:[%s5 + $0x268] sm:$0xff]
    %v637 = vld [vmem:[%s5 + $0x270] sm:$0xff]
    %v638 = vld [vmem:[%s5 + $0x278] sm:$0xff]
    %v639 = vld [vmem:[%s5 + $0x280] sm:$0xf]
    %v640 = vld [vmem:[%s5 + $0x284] sm:$0xff]
    %v641 = vld [vmem:[%s5 + $0x28c] sm:$0xff]
    %v642 = vld [vmem:[%s5 + $0x294] sm:$0xff]
    %v643 = vld [vmem:[%s5 + $0x29c] sm:$0xf]
    %v644 = vld [vmem:[%s5 + $0x2a0] sm:$0xff]
    %v645 = vld [vmem:[%s5 + $0x2a8] sm:$0xff]
    %v646 = vld [vmem:[%s5 + $0x2b0] sm:$0xff]
    %v647 = vld [vmem:[%s5 + $0x2b8] sm:$0xf]
    %v648 = vld [vmem:[%s5 + $0x2bc] sm:$0xff]
    %v649 = vld [vmem:[%s5 + $0x2c4] sm:$0xff]
    %v650 = vld [vmem:[%s5 + $0x2cc] sm:$0xff]
    %v651 = vld [vmem:[%s5 + $0x2d4] sm:$0xf]
    %v652 = vld [vmem:[%s5 + $0x2d8] sm:$0xff]
    %v653 = vld [vmem:[%s5 + $0x2e0] sm:$0xff]
    %v654 = vld [vmem:[%s5 + $0x2e8] sm:$0xff]
    %v655 = vld [vmem:[%s5 + $0x2f0] sm:$0xf]
    %v656 = vld [vmem:[%s5 + $0x2f4] sm:$0xff]
    %v657 = vld [vmem:[%s5 + $0x2fc] sm:$0xff]
    %v658 = vld [vmem:[%s5 + $0x304] sm:$0xff]
    %v659 = vld [vmem:[%s5 + $0x30c] sm:$0xf]
    %v660 = vld [vmem:[%s5 + $0x310] sm:$0xff]
    %v661 = vld [vmem:[%s5 + $0x318] sm:$0xff]
    %v662 = vld [vmem:[%s5 + $0x320] sm:$0xff]
    %v663 = vld [vmem:[%s5 + $0x328] sm:$0xf]
    %v664 = vld [vmem:[%s5 + $0x32c] sm:$0xff]
    %v665 = vld [vmem:[%s5 + $0x334] sm:$0xff]
    %v666 = vld [vmem:[%s5 + $0x33c] sm:$0xff]
    %v667 = vld [vmem:[%s5 + $0x344] sm:$0xf]
    %v668 = vld [vmem:[%s5 + $0x348] sm:$0xff]
    %v669 = vld [vmem:[%s5 + $0x350] sm:$0xff]
    %v670 = vld [vmem:[%s5 + $0x358] sm:$0xff]
    %v671 = vld [vmem:[%s5 + $0x360] sm:$0xf]
    %v672 = vld [vmem:[%s5 + $0x364] sm:$0xff]
    %v673 = vld [vmem:[%s5 + $0x36c] sm:$0xff]
    %v674 = vld [vmem:[%s5 + $0x374] sm:$0xff]
    %v675 = vld [vmem:[%s5 + $0x37c] sm:$0xf]
    %v676 = vld [vmem:[%s6] sm:$0x7f]
    %v678 = vlaneseq
    %v679 = vshrl.u32 %v678, 7
    %v680 = vsub.s32 0, %v679
    %v681 = vrot.slane %v676, %v680
    %v682 = vlaneseq
    %v683 = vshrl.u32 %v682, 7
    %v684 = vsub.s32 1, %v683
    %v685 = vrot.slane %v676, %v684
    %v686 = vlaneseq
    %v687 = vshrl.u32 %v686, 7
    %v688 = vsub.s32 2, %v687
    %v689 = vrot.slane %v676, %v688
    %v690 = vlaneseq
    %v691 = vshrl.u32 %v690, 7
    %v692 = vsub.s32 3, %v691
    %v693 = vrot.slane %v676, %v692
    %v694 = vlaneseq
    %v695 = vshrl.u32 %v694, 7
    %v696 = vsub.s32 4, %v695
    %v697 = vrot.slane %v676, %v696
    %v698 = vlaneseq
    %v699 = vshrl.u32 %v698, 7
    %v700 = vsub.s32 5, %v699
    %v701 = vrot.slane %v676, %v700
    %v702 = vlaneseq
    %v703 = vshrl.u32 %v702, 7
    %v704 = vsub.s32 6, %v703
    %v705 = vrot.slane %v676, %v704
    %v841 = vunpack.c.l.b16 %v548
    %v842 = vunpack.c.h.b16 %v548
    %v843 = vunpack.c.l.b16 %v549
    %v844 = vunpack.c.h.b16 %v549
    %v845 = vunpack.c.l.b16 %v550
    %v846 = vunpack.c.h.b16 %v550
    %v847 = vunpack.c.l.b16 %v551
    %v848 = vunpack.c.l.b16 %v552
    %v849 = vunpack.c.h.b16 %v552
    %v850 = vunpack.c.l.b16 %v553
    %v851 = vunpack.c.h.b16 %v553
    %v852 = vunpack.c.l.b16 %v554
    %v853 = vunpack.c.h.b16 %v554
    %v854 = vunpack.c.l.b16 %v555
    %v855 = vunpack.c.l.b16 %v556
    %v856 = vunpack.c.h.b16 %v556
    %v857 = vunpack.c.l.b16 %v557
    %v858 = vunpack.c.h.b16 %v557
    %v859 = vunpack.c.l.b16 %v558
    %v860 = vunpack.c.h.b16 %v558
    %v861 = vunpack.c.l.b16 %v559
    %v862 = vunpack.c.l.b16 %v560
    %v863 = vunpack.c.h.b16 %v560
    %v864 = vunpack.c.l.b16 %v561
    %v865 = vunpack.c.h.b16 %v561
    %v866 = vunpack.c.l.b16 %v562
    %v867 = vunpack.c.h.b16 %v562
    %v868 = vunpack.c.l.b16 %v563
    %v869 = vunpack.c.l.b16 %v564
    %v870 = vunpack.c.h.b16 %v564
    %v871 = vunpack.c.l.b16 %v565
    %v872 = vunpack.c.h.b16 %v565
    %v873 = vunpack.c.l.b16 %v566
    %v874 = vunpack.c.h.b16 %v566
    %v875 = vunpack.c.l.b16 %v567
    %v876 = vunpack.c.l.b16 %v568
    %v877 = vunpack.c.h.b16 %v568
    %v878 = vunpack.c.l.b16 %v569
    %v879 = vunpack.c.h.b16 %v569
    %v880 = vunpack.c.l.b16 %v570
    %v881 = vunpack.c.h.b16 %v570
    %v882 = vunpack.c.l.b16 %v571
    %v883 = vunpack.c.l.b16 %v572
    %v884 = vunpack.c.h.b16 %v572
    %v885 = vunpack.c.l.b16 %v573
    %v886 = vunpack.c.h.b16 %v573
    %v887 = vunpack.c.l.b16 %v574
    %v888 = vunpack.c.h.b16 %v574
    %v889 = vunpack.c.l.b16 %v575
    %v890 = vunpack.c.l.b16 %v576
    %v891 = vunpack.c.h.b16 %v576
    %v892 = vunpack.c.l.b16 %v577
    %v893 = vunpack.c.h.b16 %v577
    %v894 = vunpack.c.l.b16 %v578
    %v895 = vunpack.c.h.b16 %v578
    %v896 = vunpack.c.l.b16 %v579
    %v897 = vunpack.c.l.b16 %v580
    %v898 = vunpack.c.h.b16 %v580
    %v899 = vunpack.c.l.b16 %v581
    %v900 = vunpack.c.h.b16 %v581
    %v901 = vunpack.c.l.b16 %v582
    %v902 = vunpack.c.h.b16 %v582
    %v903 = vunpack.c.l.b16 %v583
    %v904 = vunpack.c.l.b16 %v584
    %v905 = vunpack.c.h.b16 %v584
    %v906 = vunpack.c.l.b16 %v585
    %v907 = vunpack.c.h.b16 %v585
    %v908 = vunpack.c.l.b16 %v586
    %v909 = vunpack.c.h.b16 %v586
    %v910 = vunpack.c.l.b16 %v587
    %v911 = vunpack.c.l.b16 %v588
    %v912 = vunpack.c.h.b16 %v588
    %v913 = vunpack.c.l.b16 %v589
    %v914 = vunpack.c.h.b16 %v589
    %v915 = vunpack.c.l.b16 %v590
    %v916 = vunpack.c.h.b16 %v590
    %v917 = vunpack.c.l.b16 %v591
    %v918 = vunpack.c.l.b16 %v592
    %v919 = vunpack.c.h.b16 %v592
    %v920 = vunpack.c.l.b16 %v593
    %v921 = vunpack.c.h.b16 %v593
    %v922 = vunpack.c.l.b16 %v594
    %v923 = vunpack.c.h.b16 %v594
    %v924 = vunpack.c.l.b16 %v595
    %v925 = vunpack.c.l.b16 %v596
    %v926 = vunpack.c.h.b16 %v596
    %v927 = vunpack.c.l.b16 %v597
    %v928 = vunpack.c.h.b16 %v597
    %v929 = vunpack.c.l.b16 %v598
    %v930 = vunpack.c.h.b16 %v598
    %v931 = vunpack.c.l.b16 %v599
    %v932 = vunpack.c.l.b16 %v600
    %v933 = vunpack.c.h.b16 %v600
    %v934 = vunpack.c.l.b16 %v601
    %v935 = vunpack.c.h.b16 %v601
    %v936 = vunpack.c.l.b16 %v602
    %v937 = vunpack.c.h.b16 %v602
    %v938 = vunpack.c.l.b16 %v603
    %v939 = vunpack.c.l.b16 %v604
    %v940 = vunpack.c.h.b16 %v604
    %v941 = vunpack.c.l.b16 %v605
    %v942 = vunpack.c.h.b16 %v605
    %v943 = vunpack.c.l.b16 %v606
    %v944 = vunpack.c.h.b16 %v606
    %v945 = vunpack.c.l.b16 %v607
    %v946 = vunpack.c.l.b16 %v608
    %v947 = vunpack.c.h.b16 %v608
    %v948 = vunpack.c.l.b16 %v609
    %v949 = vunpack.c.h.b16 %v609
    %v950 = vunpack.c.l.b16 %v610
    %v951 = vunpack.c.h.b16 %v610
    %v952 = vunpack.c.l.b16 %v611
    %v953 = vunpack.c.l.b16 %v612
    %v954 = vunpack.c.h.b16 %v612
    %v955 = vunpack.c.l.b16 %v613
    %v956 = vunpack.c.h.b16 %v613
    %v957 = vunpack.c.l.b16 %v614
    %v958 = vunpack.c.h.b16 %v614
    %v959 = vunpack.c.l.b16 %v615
    %v960 = vunpack.c.l.b16 %v616
    %v961 = vunpack.c.h.b16 %v616
    %v962 = vunpack.c.l.b16 %v617
    %v963 = vunpack.c.h.b16 %v617
    %v964 = vunpack.c.l.b16 %v618
    %v965 = vunpack.c.h.b16 %v618
    %v966 = vunpack.c.l.b16 %v619
    %v967 = vunpack.c.l.b16 %v620
    %v968 = vunpack.c.h.b16 %v620
    %v969 = vunpack.c.l.b16 %v621
    %v970 = vunpack.c.h.b16 %v621
    %v971 = vunpack.c.l.b16 %v622
    %v972 = vunpack.c.h.b16 %v622
    %v973 = vunpack.c.l.b16 %v623
    %v974 = vunpack.c.l.b16 %v624
    %v975 = vunpack.c.h.b16 %v624
    %v976 = vunpack.c.l.b16 %v625
    %v977 = vunpack.c.h.b16 %v625
    %v978 = vunpack.c.l.b16 %v626
    %v979 = vunpack.c.h.b16 %v626
    %v980 = vunpack.c.l.b16 %v627
    %v981 = vunpack.c.l.b16 %v628
    %v982 = vunpack.c.h.b16 %v628
    %v983 = vunpack.c.l.b16 %v629
    %v984 = vunpack.c.h.b16 %v629
    %v985 = vunpack.c.l.b16 %v630
    %v986 = vunpack.c.h.b16 %v630
    %v987 = vunpack.c.l.b16 %v631
    %v988 = vunpack.c.l.b16 %v632
    %v989 = vunpack.c.h.b16 %v632
    %v990 = vunpack.c.l.b16 %v633
    %v991 = vunpack.c.h.b16 %v633
    %v992 = vunpack.c.l.b16 %v634
    %v993 = vunpack.c.h.b16 %v634
    %v994 = vunpack.c.l.b16 %v635
    %v995 = vunpack.c.l.b16 %v636
    %v996 = vunpack.c.h.b16 %v636
    %v997 = vunpack.c.l.b16 %v637
    %v998 = vunpack.c.h.b16 %v637
    %v999 = vunpack.c.l.b16 %v638
    %v1000 = vunpack.c.h.b16 %v638
    %v1001 = vunpack.c.l.b16 %v639
    %v1002 = vunpack.c.l.b16 %v640
    %v1003 = vunpack.c.h.b16 %v640
    %v1004 = vunpack.c.l.b16 %v641
    %v1005 = vunpack.c.h.b16 %v641
    %v1006 = vunpack.c.l.b16 %v642
    %v1007 = vunpack.c.h.b16 %v642
    %v1008 = vunpack.c.l.b16 %v643
    %v1009 = vunpack.c.l.b16 %v644
    %v1010 = vunpack.c.h.b16 %v644
    %v1011 = vunpack.c.l.b16 %v645
    %v1012 = vunpack.c.h.b16 %v645
    %v1013 = vunpack.c.l.b16 %v646
    %v1014 = vunpack.c.h.b16 %v646
    %v1015 = vunpack.c.l.b16 %v647
    %v1016 = vunpack.c.l.b16 %v648
    %v1017 = vunpack.c.h.b16 %v648
    %v1018 = vunpack.c.l.b16 %v649
    %v1019 = vunpack.c.h.b16 %v649
    %v1020 = vunpack.c.l.b16 %v650
    %v1021 = vunpack.c.h.b16 %v650
    %v1022 = vunpack.c.l.b16 %v651
    %v1023 = vunpack.c.l.b16 %v652
    %v1024 = vunpack.c.h.b16 %v652
    %v1025 = vunpack.c.l.b16 %v653
    %v1026 = vunpack.c.h.b16 %v653
    %v1027 = vunpack.c.l.b16 %v654
    %v1028 = vunpack.c.h.b16 %v654
    %v1029 = vunpack.c.l.b16 %v655
    %v1030 = vunpack.c.l.b16 %v656
    %v1031 = vunpack.c.h.b16 %v656
    %v1032 = vunpack.c.l.b16 %v657
    %v1033 = vunpack.c.h.b16 %v657
    %v1034 = vunpack.c.l.b16 %v658
    %v1035 = vunpack.c.h.b16 %v658
    %v1036 = vunpack.c.l.b16 %v659
    %v1037 = vunpack.c.l.b16 %v660
    %v1038 = vunpack.c.h.b16 %v660
    %v1039 = vunpack.c.l.b16 %v661
    %v1040 = vunpack.c.h.b16 %v661
    %v1041 = vunpack.c.l.b16 %v662
    %v1042 = vunpack.c.h.b16 %v662
    %v1043 = vunpack.c.l.b16 %v663
    %v1044 = vunpack.c.l.b16 %v664
    %v1045 = vunpack.c.h.b16 %v664
    %v1046 = vunpack.c.l.b16 %v665
    %v1047 = vunpack.c.h.b16 %v665
    %v1048 = vunpack.c.l.b16 %v666
    %v1049 = vunpack.c.h.b16 %v666
    %v1050 = vunpack.c.l.b16 %v667
    %v1051 = vunpack.c.l.b16 %v668
    %v1052 = vunpack.c.h.b16 %v668
    %v1053 = vunpack.c.l.b16 %v669
    %v1054 = vunpack.c.h.b16 %v669
    %v1055 = vunpack.c.l.b16 %v670
    %v1056 = vunpack.c.h.b16 %v670
    %v1057 = vunpack.c.l.b16 %v671
    %v1058 = vunpack.c.l.b16 %v672
    %v1059 = vunpack.c.h.b16 %v672
    %v1060 = vunpack.c.l.b16 %v673
    %v1061 = vunpack.c.h.b16 %v673
    %v1062 = vunpack.c.l.b16 %v674
    %v1063 = vunpack.c.h.b16 %v674
    %v1064 = vunpack.c.l.b16 %v675
    %v1065 = vpack.c.b16 %v848, %v841
    %v1066 = vpack.c.b16 %v849, %v842
    %v1067 = vpack.c.b16 %v850, %v843
    %v1068 = vpack.c.b16 %v851, %v844
    %v1069 = vpack.c.b16 %v852, %v845
    %v1070 = vpack.c.b16 %v853, %v846
    %v1071 = vpack.c.b16 %v854, %v847
    %v1072 = vpack.c.b16 %v862, %v855
    %v1073 = vpack.c.b16 %v863, %v856
    %v1074 = vpack.c.b16 %v864, %v857
    %v1075 = vpack.c.b16 %v865, %v858
    %v1076 = vpack.c.b16 %v866, %v859
    %v1077 = vpack.c.b16 %v867, %v860
    %v1078 = vpack.c.b16 %v868, %v861
    %v1079 = vpack.c.b16 %v876, %v869
    %v1080 = vpack.c.b16 %v877, %v870
    %v1081 = vpack.c.b16 %v878, %v871
    %v1082 = vpack.c.b16 %v879, %v872
    %v1083 = vpack.c.b16 %v880, %v873
    %v1084 = vpack.c.b16 %v881, %v874
    %v1085 = vpack.c.b16 %v882, %v875
    %v1086 = vpack.c.b16 %v890, %v883
    %v1087 = vpack.c.b16 %v891, %v884
    %v1088 = vpack.c.b16 %v892, %v885
    %v1089 = vpack.c.b16 %v893, %v886
    %v1090 = vpack.c.b16 %v894, %v887
    %v1091 = vpack.c.b16 %v895, %v888
    %v1092 = vpack.c.b16 %v896, %v889
    %v1093 = vpack.c.b16 %v904, %v897
    %v1094 = vpack.c.b16 %v905, %v898
    %v1095 = vpack.c.b16 %v906, %v899
    %v1096 = vpack.c.b16 %v907, %v900
    %v1097 = vpack.c.b16 %v908, %v901
    %v1098 = vpack.c.b16 %v909, %v902
    %v1099 = vpack.c.b16 %v910, %v903
    %v1100 = vpack.c.b16 %v918, %v911
    %v1101 = vpack.c.b16 %v919, %v912
    %v1102 = vpack.c.b16 %v920, %v913
    %v1103 = vpack.c.b16 %v921, %v914
    %v1104 = vpack.c.b16 %v922, %v915
    %v1105 = vpack.c.b16 %v923, %v916
    %v1106 = vpack.c.b16 %v924, %v917
    %v1107 = vpack.c.b16 %v932, %v925
    %v1108 = vpack.c.b16 %v933, %v926
    %v1109 = vpack.c.b16 %v934, %v927
    %v1110 = vpack.c.b16 %v935, %v928
    %v1111 = vpack.c.b16 %v936, %v929
    %v1112 = vpack.c.b16 %v937, %v930
    %v1113 = vpack.c.b16 %v938, %v931
    %v1114 = vpack.c.b16 %v946, %v939
    %v1115 = vpack.c.b16 %v947, %v940
    %v1116 = vpack.c.b16 %v948, %v941
    %v1117 = vpack.c.b16 %v949, %v942
    %v1118 = vpack.c.b16 %v950, %v943
    %v1119 = vpack.c.b16 %v951, %v944
    %v1120 = vpack.c.b16 %v952, %v945
    %v1121 = vpack.c.b16 %v960, %v953
    %v1122 = vpack.c.b16 %v961, %v954
    %v1123 = vpack.c.b16 %v962, %v955
    %v1124 = vpack.c.b16 %v963, %v956
    %v1125 = vpack.c.b16 %v964, %v957
    %v1126 = vpack.c.b16 %v965, %v958
    %v1127 = vpack.c.b16 %v966, %v959
    %v1128 = vpack.c.b16 %v974, %v967
    %v1129 = vpack.c.b16 %v975, %v968
    %v1130 = vpack.c.b16 %v976, %v969
    %v1131 = vpack.c.b16 %v977, %v970
    %v1132 = vpack.c.b16 %v978, %v971
    %v1133 = vpack.c.b16 %v979, %v972
    %v1134 = vpack.c.b16 %v980, %v973
    %v1135 = vpack.c.b16 %v988, %v981
    %v1136 = vpack.c.b16 %v989, %v982
    %v1137 = vpack.c.b16 %v990, %v983
    %v1138 = vpack.c.b16 %v991, %v984
    %v1139 = vpack.c.b16 %v992, %v985
    %v1140 = vpack.c.b16 %v993, %v986
    %v1141 = vpack.c.b16 %v994, %v987
    %v1142 = vpack.c.b16 %v1002, %v995
    %v1143 = vpack.c.b16 %v1003, %v996
    %v1144 = vpack.c.b16 %v1004, %v997
    %v1145 = vpack.c.b16 %v1005, %v998
    %v1146 = vpack.c.b16 %v1006, %v999
    %v1147 = vpack.c.b16 %v1007, %v1000
    %v1148 = vpack.c.b16 %v1008, %v1001
    %v1149 = vpack.c.b16 %v1016, %v1009
    %v1150 = vpack.c.b16 %v1017, %v1010
    %v1151 = vpack.c.b16 %v1018, %v1011
    %v1152 = vpack.c.b16 %v1019, %v1012
    %v1153 = vpack.c.b16 %v1020, %v1013
    %v1154 = vpack.c.b16 %v1021, %v1014
    %v1155 = vpack.c.b16 %v1022, %v1015
    %v1156 = vpack.c.b16 %v1030, %v1023
    %v1157 = vpack.c.b16 %v1031, %v1024
    %v1158 = vpack.c.b16 %v1032, %v1025
    %v1159 = vpack.c.b16 %v1033, %v1026
    %v1160 = vpack.c.b16 %v1034, %v1027
    %v1161 = vpack.c.b16 %v1035, %v1028
    %v1162 = vpack.c.b16 %v1036, %v1029
    %v1163 = vpack.c.b16 %v1044, %v1037
    %v1164 = vpack.c.b16 %v1045, %v1038
    %v1165 = vpack.c.b16 %v1046, %v1039
    %v1166 = vpack.c.b16 %v1047, %v1040
    %v1167 = vpack.c.b16 %v1048, %v1041
    %v1168 = vpack.c.b16 %v1049, %v1042
    %v1169 = vpack.c.b16 %v1050, %v1043
    %v1170 = vpack.c.b16 %v1058, %v1051
    %v1171 = vpack.c.b16 %v1059, %v1052
    %v1172 = vpack.c.b16 %v1060, %v1053
    %v1173 = vpack.c.b16 %v1061, %v1054
    %v1174 = vpack.c.b16 %v1062, %v1055
    %v1175 = vpack.c.b16 %v1063, %v1056
    %v1176 = vpack.c.b16 %v1064, %v1057
    %1289 = vmatprep.subr.bf16.mxu0 %v1115
    %1290 = vmatpush1.bf16.msra.mxu0 %v1114
    %1291 = vmatprep.subr.bf16.mxu0 %v1108
    %1292 = vmatpush1.bf16.msra.mxu0 %v1107
    %1293 = vmatprep.subr.bf16.mxu0 %v1101
    %1294 = vmatpush1.bf16.msra.mxu0 %v1100
    %1295 = vmatprep.subr.bf16.mxu0 %v1094
    %1296 = vmatpush1.bf16.msra.mxu0 %v1093
    %1297 = vmatprep.subr.bf16.mxu0 %v1087
    %1298 = vmatpush1.bf16.msra.mxu0 %v1086
    %1299 = vmatprep.subr.bf16.mxu0 %v1080
    %1300 = vmatpush1.bf16.msra.mxu0 %v1079
    %1301 = vmatprep.subr.bf16.mxu0 %v1073
    %1302 = vmatpush1.bf16.msra.mxu0 %v1072
    %1303 = vmatprep.subr.bf16.mxu0 %v1066
    %1304 = vmatpush1.bf16.msra.mxu0 %v1065
    %1305 = vmatprep.subr.bf16.mxu0 %v1171
    %1306 = vmatpush2.bf16.msra.mxu0 %v1170
    %1307 = vmatprep.subr.bf16.mxu0 %v1164
    %1308 = vmatpush2.bf16.msra.mxu0 %v1163
    %1309 = vmatprep.subr.bf16.mxu0 %v1157
    %1310 = vmatpush2.bf16.msra.mxu0 %v1156
    %1311 = vmatprep.subr.bf16.mxu0 %v1150
    %1312 = vmatpush2.bf16.msra.mxu0 %v1149
    %1313 = vmatprep.subr.bf16.mxu0 %v1143
    %1314 = vmatpush2.bf16.msra.mxu0 %v1142
    %1315 = vmatprep.subr.bf16.mxu0 %v1136
    %1316 = vmatpush2.bf16.msra.mxu0 %v1135
    %1317 = vmatprep.subr.bf16.mxu0 %v1129
    %1318 = vmatpush2.bf16.msra.mxu0 %v1128
    %1319 = vmatprep.subr.bf16.mxu0 %v1122
    %1320 = vmatpush2.bf16.msra.mxu0 %v1121
    %1321 = vmatprep.mubr.bf16.mxu0 %v541
    %1322 = vmatmul.mubr.bf16.gmra.mxu0 %v540
    %v1323 = vpop.f32.mrf.mxu0
    %v1324 = vadd.f32 %v681, %v1323
    %v1325 = vpop.f32.mrf.mxu0
    %v1326 = vadd.f32 %v685, %v1325
    %v1327 = vpop.f32.mrf.mxu0
    %v1328 = vadd.f32 %v681, %v1327
    %v1329 = vpop.f32.mrf.mxu0
    %v1330 = vadd.f32 %v685, %v1329
    %1331 = vmatprep.mubr.bf16.mxu0 %v543
    %1332 = vmatmul.mubr.bf16.gmra.mxu0 %v542
    %v1333 = vpop.f32.mrf.mxu0
    %v1334 = vadd.f32 %v681, %v1333
    %v1335 = vpop.f32.mrf.mxu0
    %v1336 = vadd.f32 %v685, %v1335
    %v1337 = vpop.f32.mrf.mxu0
    %v1338 = vadd.f32 %v681, %v1337
    %v1339 = vpop.f32.mrf.mxu0
    %v1340 = vadd.f32 %v685, %v1339
    %1341 = vmatprep.mubr.bf16.mxu0 %v545
    %1342 = vmatmul.mubr.bf16.gmra.mxu0 %v544
    %v1343 = vpop.f32.mrf.mxu0
    %v1344 = vadd.f32 %v681, %v1343
    %v1345 = vpop.f32.mrf.mxu0
    %v1346 = vadd.f32 %v685, %v1345
    %v1347 = vpop.f32.mrf.mxu0
    %v1348 = vadd.f32 %v681, %v1347
    %v1349 = vpop.f32.mrf.mxu0
    %v1350 = vadd.f32 %v685, %v1349
    %1351 = vmatprep.mubr.bf16.mxu0 %v547
    %1352 = vmatmul.mubr.bf16.gmra.mxu0 %v546
    %v1353 = vpop.f32.mrf.mxu0
    %v1354 = vadd.f32 %v681, %v1353
    %v1355 = vpop.f32.mrf.mxu0
    %v1356 = vadd.f32 %v685, %v1355
    %v1357 = vpop.f32.mrf.mxu0
    %v1358 = vadd.f32 %v681, %v1357
    %v1359 = vpop.f32.mrf.mxu0
    %v1360 = vadd.f32 %v685, %v1359
    %1361 = vdwg.mxu0
    %1362 = vmatprep.subr.bf16.mxu0 %v1117
    %1363 = vmatpush1.bf16.msra.mxu0 %v1116
    %1364 = vmatprep.subr.bf16.mxu0 %v1110
    %1365 = vmatpush1.bf16.msra.mxu0 %v1109
    %1366 = vmatprep.subr.bf16.mxu0 %v1103
    %1367 = vmatpush1.bf16.msra.mxu0 %v1102
    %1368 = vmatprep.subr.bf16.mxu0 %v1096
    %1369 = vmatpush1.bf16.msra.mxu0 %v1095
    %1370 = vmatprep.subr.bf16.mxu0 %v1089
    %1371 = vmatpush1.bf16.msra.mxu0 %v1088
    %1372 = vmatprep.subr.bf16.mxu0 %v1082
    %1373 = vmatpush1.bf16.msra.mxu0 %v1081
    %1374 = vmatprep.subr.bf16.mxu0 %v1075
    %1375 = vmatpush1.bf16.msra.mxu0 %v1074
    %1376 = vmatprep.subr.bf16.mxu0 %v1068
    %1377 = vmatpush1.bf16.msra.mxu0 %v1067
    %1378 = vmatprep.subr.bf16.mxu0 %v1173
    %1379 = vmatpush2.bf16.msra.mxu0 %v1172
    %1380 = vmatprep.subr.bf16.mxu0 %v1166
    %1381 = vmatpush2.bf16.msra.mxu0 %v1165
    %1382 = vmatprep.subr.bf16.mxu0 %v1159
    %1383 = vmatpush2.bf16.msra.mxu0 %v1158
    %1384 = vmatprep.subr.bf16.mxu0 %v1152
    %1385 = vmatpush2.bf16.msra.mxu0 %v1151
    %1386 = vmatprep.subr.bf16.mxu0 %v1145
    %1387 = vmatpush2.bf16.msra.mxu0 %v1144
    %1388 = vmatprep.subr.bf16.mxu0 %v1138
    %1389 = vmatpush2.bf16.msra.mxu0 %v1137
    %1390 = vmatprep.subr.bf16.mxu0 %v1131
    %1391 = vmatpush2.bf16.msra.mxu0 %v1130
    %1392 = vmatprep.subr.bf16.mxu0 %v1124
    %1393 = vmatpush2.bf16.msra.mxu0 %v1123
    %1394 = vmatprep.mubr.bf16.mxu0 %v541
    %1395 = vmatmul.mubr.bf16.gmra.mxu0 %v540
    %v1396 = vpop.f32.mrf.mxu0
    %v1397 = vadd.f32 %v689, %v1396
    %v1398 = vpop.f32.mrf.mxu0
    %v1399 = vadd.f32 %v693, %v1398
    %v1400 = vpop.f32.mrf.mxu0
    %v1401 = vadd.f32 %v689, %v1400
    %v1402 = vpop.f32.mrf.mxu0
    %v1403 = vadd.f32 %v693, %v1402
    %1404 = vmatprep.mubr.bf16.mxu0 %v543
    %1405 = vmatmul.mubr.bf16.gmra.mxu0 %v542
    %v1406 = vpop.f32.mrf.mxu0
    %v1407 = vadd.f32 %v689, %v1406
    %v1408 = vpop.f32.mrf.mxu0
    %v1409 = vadd.f32 %v693, %v1408
    %v1410 = vpop.f32.mrf.mxu0
    %v1411 = vadd.f32 %v689, %v1410
    %v1412 = vpop.f32.mrf.mxu0
    %v1413 = vadd.f32 %v693, %v1412
    %1414 = vmatprep.mubr.bf16.mxu0 %v545
    %1415 = vmatmul.mubr.bf16.gmra.mxu0 %v544
    %v1416 = vpop.f32.mrf.mxu0
    %v1417 = vadd.f32 %v689, %v1416
    %v1418 = vpop.f32.mrf.mxu0
    %v1419 = vadd.f32 %v693, %v1418
    %v1420 = vpop.f32.mrf.mxu0
    %v1421 = vadd.f32 %v689, %v1420
    %v1422 = vpop.f32.mrf.mxu0
    %v1423 = vadd.f32 %v693, %v1422
    %1424 = vmatprep.mubr.bf16.mxu0 %v547
    %1425 = vmatmul.mubr.bf16.gmra.mxu0 %v546
    %v1426 = vpop.f32.mrf.mxu0
    %v1427 = vadd.f32 %v689, %v1426
    %v1428 = vpop.f32.mrf.mxu0
    %v1429 = vadd.f32 %v693, %v1428
    %v1430 = vpop.f32.mrf.mxu0
    %v1431 = vadd.f32 %v689, %v1430
    %v1432 = vpop.f32.mrf.mxu0
    %v1433 = vadd.f32 %v693, %v1432
    %1434 = vdwg.mxu0
    %1435 = vmatprep.subr.bf16.mxu0 %v1119
    %1436 = vmatpush1.bf16.msra.mxu0 %v1118
    %1437 = vmatprep.subr.bf16.mxu0 %v1112
    %1438 = vmatpush1.bf16.msra.mxu0 %v1111
    %1439 = vmatprep.subr.bf16.mxu0 %v1105
    %1440 = vmatpush1.bf16.msra.mxu0 %v1104
    %1441 = vmatprep.subr.bf16.mxu0 %v1098
    %1442 = vmatpush1.bf16.msra.mxu0 %v1097
    %1443 = vmatprep.subr.bf16.mxu0 %v1091
    %1444 = vmatpush1.bf16.msra.mxu0 %v1090
    %1445 = vmatprep.subr.bf16.mxu0 %v1084
    %1446 = vmatpush1.bf16.msra.mxu0 %v1083
    %1447 = vmatprep.subr.bf16.mxu0 %v1077
    %1448 = vmatpush1.bf16.msra.mxu0 %v1076
    %1449 = vmatprep.subr.bf16.mxu0 %v1070
    %1450 = vmatpush1.bf16.msra.mxu0 %v1069
    %1451 = vmatprep.subr.bf16.mxu0 %v1175
    %1452 = vmatpush2.bf16.msra.mxu0 %v1174
    %1453 = vmatprep.subr.bf16.mxu0 %v1168
    %1454 = vmatpush2.bf16.msra.mxu0 %v1167
    %1455 = vmatprep.subr.bf16.mxu0 %v1161
    %1456 = vmatpush2.bf16.msra.mxu0 %v1160
    %1457 = vmatprep.subr.bf16.mxu0 %v1154
    %1458 = vmatpush2.bf16.msra.mxu0 %v1153
    %1459 = vmatprep.subr.bf16.mxu0 %v1147
    %1460 = vmatpush2.bf16.msra.mxu0 %v1146
    %1461 = vmatprep.subr.bf16.mxu0 %v1140
    %1462 = vmatpush2.bf16.msra.mxu0 %v1139
    %1463 = vmatprep.subr.bf16.mxu0 %v1133
    %1464 = vmatpush2.bf16.msra.mxu0 %v1132
    %1465 = vmatprep.subr.bf16.mxu0 %v1126
    %1466 = vmatpush2.bf16.msra.mxu0 %v1125
    %1467 = vmatprep.mubr.bf16.mxu0 %v541
    %1468 = vmatmul.mubr.bf16.gmra.mxu0 %v540
    %v1469 = vpop.f32.mrf.mxu0
    %v1470 = vadd.f32 %v697, %v1469
    %v1471 = vpop.f32.mrf.mxu0
    %v1472 = vadd.f32 %v701, %v1471
    %v1473 = vpop.f32.mrf.mxu0
    %v1474 = vadd.f32 %v697, %v1473
    %v1475 = vpop.f32.mrf.mxu0
    %v1476 = vadd.f32 %v701, %v1475
    %1477 = vmatprep.mubr.bf16.mxu0 %v543
    %1478 = vmatmul.mubr.bf16.gmra.mxu0 %v542
    %v1479 = vpop.f32.mrf.mxu0
    %v1480 = vadd.f32 %v697, %v1479
    %v1481 = vpop.f32.mrf.mxu0
    %v1482 = vadd.f32 %v701, %v1481
    %v1483 = vpop.f32.mrf.mxu0
    %v1484 = vadd.f32 %v697, %v1483
    %v1485 = vpop.f32.mrf.mxu0
    %v1486 = vadd.f32 %v701, %v1485
    %1487 = vmatprep.mubr.bf16.mxu0 %v545
    %1488 = vmatmul.mubr.bf16.gmra.mxu0 %v544
    %v1489 = vpop.f32.mrf.mxu0
    %v1490 = vadd.f32 %v697, %v1489
    %v1491 = vpop.f32.mrf.mxu0
    %v1492 = vadd.f32 %v701, %v1491
    %v1493 = vpop.f32.mrf.mxu0
    %v1494 = vadd.f32 %v697, %v1493
    %v1495 = vpop.f32.mrf.mxu0
    %v1496 = vadd.f32 %v701, %v1495
    %1497 = vmatprep.mubr.bf16.mxu0 %v547
    %1498 = vmatmul.mubr.bf16.gmra.mxu0 %v546
    %v1499 = vpop.f32.mrf.mxu0
    %v1500 = vadd.f32 %v697, %v1499
    %v1501 = vpop.f32.mrf.mxu0
    %v1502 = vadd.f32 %v701, %v1501
    %v1503 = vpop.f32.mrf.mxu0
    %v1504 = vadd.f32 %v697, %v1503
    %v1505 = vpop.f32.mrf.mxu0
    %v1506 = vadd.f32 %v701, %v1505
    %1507 = vdwg.mxu0
    %1508 = vmatprep.subr.bf16.mxu0 0
    %1509 = vmatpush1.bf16.msra.mxu0 %v1120
    %1510 = vmatprep.subr.bf16.mxu0 0
    %1511 = vmatpush1.bf16.msra.mxu0 %v1113
    %1512 = vmatprep.subr.bf16.mxu0 0
    %1513 = vmatpush1.bf16.msra.mxu0 %v1106
    %1514 = vmatprep.subr.bf16.mxu0 0
    %1515 = vmatpush1.bf16.msra.mxu0 %v1099
    %1516 = vmatprep.subr.bf16.mxu0 0
    %1517 = vmatpush1.bf16.msra.mxu0 %v1092
    %1518 = vmatprep.subr.bf16.mxu0 0
    %1519 = vmatpush1.bf16.msra.mxu0 %v1085
    %1520 = vmatprep.subr.bf16.mxu0 0
    %1521 = vmatpush1.bf16.msra.mxu0 %v1078
    %1522 = vmatprep.subr.bf16.mxu0 0
    %1523 = vmatpush1.bf16.msra.mxu0 %v1071
    %1524 = vmatprep.subr.bf16.mxu0 0
    %1525 = vmatpush2.bf16.msra.mxu0 %v1176
    %1526 = vmatprep.subr.bf16.mxu0 0
    %1527 = vmatpush2.bf16.msra.mxu0 %v1169
    %1528 = vmatprep.subr.bf16.mxu0 0
    %1529 = vmatpush2.bf16.msra.mxu0 %v1162
    %1530 = vmatprep.subr.bf16.mxu0 0
    %1531 = vmatpush2.bf16.msra.mxu0 %v1155
    %1532 = vmatprep.subr.bf16.mxu0 0
    %1533 = vmatpush2.bf16.msra.mxu0 %v1148
    %1534 = vmatprep.subr.bf16.mxu0 0
    %1535 = vmatpush2.bf16.msra.mxu0 %v1141
    %1536 = vmatprep.subr.bf16.mxu0 0
    %1537 = vmatpush2.bf16.msra.mxu0 %v1134
    %1538 = vmatprep.subr.bf16.mxu0 0
    %1539 = vmatpush2.bf16.msra.mxu0 %v1127
    %1540 = vmatprep.mubr.bf16.mxu0 %v541
    %1541 = vmatmul.mubr.bf16.gmra.mxu0 %v540
    %v1542 = vpop.f32.mrf.mxu0
    %v1543 = vadd.f32 %v705, %v1542
    %v1544 = vpop.f32.mrf.mxu0
    %v1545 = vpop.f32.mrf.mxu0
    %v1546 = vadd.f32 %v705, %v1545
    %v1547 = vpop.f32.mrf.mxu0
    %1548 = vmatprep.mubr.bf16.mxu0 %v543
    %1549 = vmatmul.mubr.bf16.gmra.mxu0 %v542
    %v1550 = vpop.f32.mrf.mxu0
    %v1551 = vadd.f32 %v705, %v1550
    %v1552 = vpop.f32.mrf.mxu0
    %v1553 = vpop.f32.mrf.mxu0
    %v1554 = vadd.f32 %v705, %v1553
    %v1555 = vpop.f32.mrf.mxu0
    %1556 = vmatprep.mubr.bf16.mxu0 %v545
    %1557 = vmatmul.mubr.bf16.gmra.mxu0 %v544
    %v1558 = vpop.f32.mrf.mxu0
    %v1559 = vadd.f32 %v705, %v1558
    %v1560 = vpop.f32.mrf.mxu0
    %v1561 = vpop.f32.mrf.mxu0
    %v1562 = vadd.f32 %v705, %v1561
    %v1563 = vpop.f32.mrf.mxu0
    %1564 = vmatprep.mubr.bf16.mxu0 %v547
    %1565 = vmatmul.mubr.bf16.gmra.mxu0 %v546
    %v1566 = vpop.f32.mrf.mxu0
    %v1567 = vadd.f32 %v705, %v1566
    %v1568 = vpop.f32.mrf.mxu0
    %v1569 = vpop.f32.mrf.mxu0
    %v1570 = vadd.f32 %v705, %v1569
    %v1571 = vpop.f32.mrf.mxu0
    %1572 = vdwg.mxu0
    %v1573 = vtanh.pop %v1324
    %v1574 = vtanh.pop %v1326
    %v1575 = vtanh.pop %v1397
    %v1576 = vtanh.pop %v1399
    %v1577 = vtanh.pop %v1470
    %v1578 = vtanh.pop %v1472
    %v1579 = vtanh.pop %v1543
    %v1580 = vtanh.pop %v1328
    %v1581 = vtanh.pop %v1330
    %v1582 = vtanh.pop %v1401
    %v1583 = vtanh.pop %v1403
    %v1584 = vtanh.pop %v1474
    %v1585 = vtanh.pop %v1476
    %v1586 = vtanh.pop %v1546
    %v1587 = vtanh.pop %v1334
    %v1588 = vtanh.pop %v1336
    %v1589 = vtanh.pop %v1407
    %v1590 = vtanh.pop %v1409
    %v1591 = vtanh.pop %v1480
    %v1592 = vtanh.pop %v1482
    %v1593 = vtanh.pop %v1551
    %v1594 = vtanh.pop %v1338
    %v1595 = vtanh.pop %v1340
    %v1596 = vtanh.pop %v1411
    %v1597 = vtanh.pop %v1413
    %v1598 = vtanh.pop %v1484
    %v1599 = vtanh.pop %v1486
    %v1600 = vtanh.pop %v1554
    %v1601 = vtanh.pop %v1344
    %v1602 = vtanh.pop %v1346
    %v1603 = vtanh.pop %v1417
    %v1604 = vtanh.pop %v1419
    %v1605 = vtanh.pop %v1490
    %v1606 = vtanh.pop %v1492
    %v1607 = vtanh.pop %v1559
    %v1608 = vtanh.pop %v1348
    %v1609 = vtanh.pop %v1350
    %v1610 = vtanh.pop %v1421
    %v1611 = vtanh.pop %v1423
    %v1612 = vtanh.pop %v1494
    %v1613 = vtanh.pop %v1496
    %v1614 = vtanh.pop %v1562
    %v1615 = vtanh.pop %v1354
    %v1616 = vtanh.pop %v1356
    %v1617 = vtanh.pop %v1427
    %v1618 = vtanh.pop %v1429
    %v1619 = vtanh.pop %v1500
    %v1620 = vtanh.pop %v1502
    %v1621 = vtanh.pop %v1567
    %v1622 = vtanh.pop %v1358
    %v1623 = vtanh.pop %v1360
    %v1624 = vtanh.pop %v1431
    %v1625 = vtanh.pop %v1433
    %v1626 = vtanh.pop %v1504
    %v1627 = vtanh.pop %v1506
    %v1628 = vtanh.pop %v1570
    %1629 = vst [vmem:[#allocation2] sm:$0xff] %v1573
    %1630 = vst [vmem:[#allocation2 + $0x8] sm:$0xff] %v1574
    %1631 = vst [vmem:[#allocation2 + $0x10] sm:$0xff] %v1575
    %1632 = vst [vmem:[#allocation2 + $0x18] sm:$0xff] %v1576
    %1633 = vst [vmem:[#allocation2 + $0x20] sm:$0xff] %v1577
    %1634 = vst [vmem:[#allocation2 + $0x28] sm:$0xff] %v1578
    %vm1635 = vcmask 130048
    %1636 = vst.msk [vmem:[#allocation2 + $0x30] sm:$0xff] %vm1635, %v1579
    %1637 = vst [vmem:[#allocation2 + $0x38] sm:$0xff] %v1580
    %1638 = vst [vmem:[#allocation2 + $0x40] sm:$0xff] %v1581
    %1639 = vst [vmem:[#allocation2 + $0x48] sm:$0xff] %v1582
    %1640 = vst [vmem:[#allocation2 + $0x50] sm:$0xff] %v1583
    %1641 = vst [vmem:[#allocation2 + $0x58] sm:$0xff] %v1584
    %1642 = vst [vmem:[#allocation2 + $0x60] sm:$0xff] %v1585
    %1643 = vst.msk [vmem:[#allocation2 + $0x68] sm:$0xff] %vm1635, %v1586
    %1644 = vst [vmem:[#allocation2 + $0x70] sm:$0xff] %v1587
    %1645 = vst [vmem:[#allocation2 + $0x78] sm:$0xff] %v1588
    %1646 = vst [vmem:[#allocation2 + $0x80] sm:$0xff] %v1589
    %1647 = vst [vmem:[#allocation2 + $0x88] sm:$0xff] %v1590
    %1648 = vst [vmem:[#allocation2 + $0x90] sm:$0xff] %v1591
    %1649 = vst [vmem:[#allocation2 + $0x98] sm:$0xff] %v1592
    %1650 = vst.msk [vmem:[#allocation2 + $0xa0] sm:$0xff] %vm1635, %v1593
    %1651 = vst [vmem:[#allocation2 + $0xa8] sm:$0xff] %v1594
    %1652 = vst [vmem:[#allocation2 + $0xb0] sm:$0xff] %v1595
    %1653 = vst [vmem:[#allocation2 + $0xb8] sm:$0xff] %v1596
    %1654 = vst [vmem:[#allocation2 + $0xc0] sm:$0xff] %v1597
    %1655 = vst [vmem:[#allocation2 + $0xc8] sm:$0xff] %v1598
    %1656 = vst [vmem:[#allocation2 + $0xd0] sm:$0xff] %v1599
    %1657 = vst.msk [vmem:[#allocation2 + $0xd8] sm:$0xff] %vm1635, %v1600
    %1658 = vst [vmem:[#allocation2 + $0xe0] sm:$0xff] %v1601
    %1659 = vst [vmem:[#allocation2 + $0xe8] sm:$0xff] %v1602
    %1660 = vst [vmem:[#allocation2 + $0xf0] sm:$0xff] %v1603
    %1661 = vst [vmem:[#allocation2 + $0xf8] sm:$0xff] %v1604
    %1662 = vst [vmem:[#allocation2 + $0x100] sm:$0xff] %v1605
    %1663 = vst [vmem:[#allocation2 + $0x108] sm:$0xff] %v1606
    %1664 = vst.msk [vmem:[#allocation2 + $0x110] sm:$0xff] %vm1635, %v1607
    %1665 = vst [vmem:[#allocation2 + $0x118] sm:$0xff] %v1608
    %1666 = vst [vmem:[#allocation2 + $0x120] sm:$0xff] %v1609
    %1667 = vst [vmem:[#allocation2 + $0x128] sm:$0xff] %v1610
    %1668 = vst [vmem:[#allocation2 + $0x130] sm:$0xff] %v1611
    %1669 = vst [vmem:[#allocation2 + $0x138] sm:$0xff] %v1612
    %1670 = vst [vmem:[#allocation2 + $0x140] sm:$0xff] %v1613
    %1671 = vst.msk [vmem:[#allocation2 + $0x148] sm:$0xff] %vm1635, %v1614
    %1672 = vst [vmem:[#allocation2 + $0x150] sm:$0xff] %v1615
    %1673 = vst [vmem:[#allocation2 + $0x158] sm:$0xff] %v1616
    %1674 = vst [vmem:[#allocation2 + $0x160] sm:$0xff] %v1617
    %1675 = vst [vmem:[#allocation2 + $0x168] sm:$0xff] %v1618
    %1676 = vst [vmem:[#allocation2 + $0x170] sm:$0xff] %v1619
    %1677 = vst [vmem:[#allocation2 + $0x178] sm:$0xff] %v1620
    %1678 = vst.msk [vmem:[#allocation2 + $0x180] sm:$0xff] %vm1635, %v1621
    %1679 = vst [vmem:[#allocation2 + $0x188] sm:$0xff] %v1622
    %1680 = vst [vmem:[#allocation2 + $0x190] sm:$0xff] %v1623
    %1681 = vst [vmem:[#allocation2 + $0x198] sm:$0xff] %v1624
    %1682 = vst [vmem:[#allocation2 + $0x1a0] sm:$0xff] %v1625
    %1683 = vst [vmem:[#allocation2 + $0x1a8] sm:$0xff] %v1626
    %1684 = vst [vmem:[#allocation2 + $0x1b0] sm:$0xff] %v1627
    %1685 = vst.msk [vmem:[#allocation2 + $0x1b8] sm:$0xff] %vm1635, %v1628
    // Predicated region
    $region30: #{generater_forward.1} parent=1 // pred_check
      _
    $region31: #{generater_forward.1} parent=1 // pred_check_branch
      %1687 = sbr.rel (0) target = $region33
    $region32: #{generater_forward.1} parent=1 // pred_region
      %s1689 = ssub.s32 7168, 7168
      %1690 = vsyncadd [#allocation3], %s1689
      %s1691 = sshll.u32 [#allocation2], 4
      %s1692 = int_to_ptr.vmem [resolvable:$true] %s1691
      %1697 = dma.vmem_to_hbm [thread:$0]  %s1692, 7168, %s7, [#allocation3], 896, 896, 56
    $region33: #{generater_forward.1} parent=1 // pred_fallthru
      _
    // Predicated region
    $region34: #{generater_forward.1} parent=1 // pred_check
      _
    $region35: #{generater_forward.1} parent=1 // pred_check_branch
      %1699 = sbr.rel (0) target = $region37
    $region36: #{generater_forward.1} parent=1 // pred_region
      %1700 = dma.done [#allocation3], 7168
    $region37: #{generater_forward.1} parent=1 // pred_fallthru
      _
    %1701 = vsyncpa [#allocation3], 1

</llo_original>
